<compile_context>
chip_gen: v6e
topology: v6e:2x2x1
jax: 0.10.0
libtpu: 0.0.40
codegen_flags: <defaults>
</compile_context>

<pallas_src>
import functools

import jax
import jax.numpy as jnp
from jax.experimental import pallas as pl
from jax.experimental.pallas import tpu as pltpu

HIDDEN = 512
EPS = 1e-5
NEG_SLOPE = 0.2
_MIB = 1024 * 1024


def _round_up(x, m):
    return ((x + m - 1) // m) * m


def _leaky_relu(x, slope=NEG_SLOPE):
    return jnp.where(x > 0, x, slope * x)


def _vmem_cap_bytes():
    """Generation-aware scoped-VMEM ceiling (v7x: 64 MiB total; v5e/v6e: 128)."""
    total = 64 * _MIB
    try:
        info = pltpu.get_tpu_info()
        total = int(getattr(info, "vmem_capacity_bytes", total))
    except Exception:
        pass  # conservative fallback (treat as v7x-sized VMEM)
    if total >= 96 * _MIB:
        return 96 * _MIB      # v5e / v6e (128 MiB physical)
    return 40 * _MIB          # v7x (64 MiB physical)


def _vmem_estimate_bytes(bp, tk, np_):
    """Rough in-kernel VMEM footprint for a given (batch, K-tile) choice."""
    return (2 * (bp * tk + tk * HIDDEN) * 2          # double-buffered bf16 x / w1 tiles
            + (HIDDEN * HIDDEN + HIDDEN * np_) * 2   # resident bf16 w2 / w3
            + (8 * HIDDEN + np_) * 4                 # packed biases + b3 (f32)
            + bp * HIDDEN * 4                        # f32 accumulator scratch
            + 2 * bp * np_ * 4)                      # double-buffered f32 output


def _choose_tk(kp, bp, np_, budget):
    """Largest K tile (multiple of 128, divisor of kp, <= cap) fitting VMEM."""
    units = kp // 128
    cap = kp if kp <= 4096 else 2048
    cands = sorted({128 * d for d in range(1, units + 1)
                    if units % d == 0 and 128 * d <= cap}, reverse=True)
    for tk in cands:
        if _vmem_estimate_bytes(bp, tk, np_) <= budget:
            return tk
    return cands[-1]


def encoder_kernel(x_ref, w1_ref, w2_ref, w3_ref, bias_ref, b3_ref,
                   out_ref, acc_ref, *, true_b):
    """Grid axis 0 tiles the K (= prod(img_shape)) dim of the first linear."""
    k = pl.program_id(0)

    @pl.when(k == 0)
    def _init():
        acc_ref[...] = jnp.zeros_like(acc_ref)

    # ---- Linear(prod(img_shape), 512): partial K-tile matmul on the MXU ----
    # bf16 operands, f32 accumulation.
    acc_ref[...] += jnp.dot(x_ref[...], w1_ref[...],
                            preferred_element_type=jnp.float32)

    @pl.when(k == pl.num_programs(0) - 1)
    def _finalize():
        bias = bias_ref[...]                      # (8, 512): rows 0..3 used
        b1, b2 = bias[0:1, :], bias[1:2, :]
        gamma, beta = bias[2:3, :], bias[3:4, :]

        # Bias + LeakyReLU(0.2) fused in one VPU pass over the accumulator.
        h = _leaky_relu(acc_ref[...] + b1)

        # ---- Linear(512, 512) ----
        h = jnp.dot(h.astype(jnp.bfloat16), w2_ref[...],
                    preferred_element_type=jnp.float32) + b2

        # ---- BatchNorm1d(512), training mode (biased var, eps=1e-5) ----
        # Padded batch rows must not pollute the statistics: mask them and
        # divide by the TRUE batch size.
        row_mask = (jax.lax.broadcasted_iota(jnp.int32, h.shape, 0)
                    < true_b).astype(jnp.float32)
        inv_b = jnp.float32(1.0 / true_b)
        mean = jnp.sum(h * row_mask, axis=0, keepdims=True) * inv_b
        d = (h - mean) * row_mask          # reused for variance and normalize
        var = jnp.sum(d * d, axis=0, keepdims=True) * inv_b
        # Fold gamma into the per-feature (1, 512) scale before broadcasting.
        scale = jax.lax.rsqrt(var + EPS) * gamma
        hn = _leaky_relu(d * scale + beta)

        # ---- Linear(512, latent_dim padded to 128 lanes) ----
        out_ref[...] = jnp.dot(hn.astype(jnp.bfloat16), w3_ref[...],
                               preferred_element_type=jnp.float32) + b3_ref[...]


def prepare_params(params, latent_dim):
    """One-time prep: pad / cast weights to MXU-friendly layouts and cache.

    Eliminates the per-call f32->bf16 re-pad/re-cast HBM traffic on w1/w2/w3
    that dominated the previous version's bandwidth.
    """
    w1, b1, w2, b2, gamma, beta, w3, b3 = params
    k_in = int(w1.shape[0])
    np_ = _round_up(max(latent_dim, 128), 128)      # lane-dense output columns
    if k_in <= 4096:
        kp = _round_up(k_in, 128)
    else:
        kp = _round_up(k_in, 2048)

    w1p = jnp.zeros((kp, HIDDEN), jnp.bfloat16).at[:k_in, :].set(
        w1.astype(jnp.bfloat16))
    w2b = w2.astype(jnp.bfloat16)
    w3p = jnp.zeros((HIDDEN, np_), jnp.bfloat16).at[:, :latent_dim].set(
        w3.astype(jnp.bfloat16))
    b3p = jnp.zeros((1, np_), jnp.float32).at[:, :latent_dim].set(
        b3.reshape(1, -1))

    # Pack b1 / b2 / gamma / beta into one sublane-aligned (8, 512) f32 block.
    bias_pack = jnp.zeros((8, HIDDEN), jnp.float32)
    bias_pack = bias_pack.at[0, :].set(b1.reshape(-1))
    bias_pack = bias_pack.at[1, :].set(b2.reshape(-1))
    bias_pack = bias_pack.at[2, :].set(gamma.reshape(-1))
    bias_pack = bias_pack.at[3, :].set(beta.reshape(-1))

    return {"w1p": w1p, "w2b": w2b, "w3p": w3p, "b3p": b3p,
            "bias_pack": bias_pack, "k_in": k_in, "latent": int(latent_dim)}


def encoder_forward(img, prepped):
    """img: (B, C, H, W) float32. Returns (B, latent_dim) float32."""
    b = img.shape[0]
    x = img.reshape(b, -1)
    k_in = prepped["k_in"]
    kp = int(prepped["w1p"].shape[0])
    np_ = int(prepped["w3p"].shape[1])
    latent = prepped["latent"]
    assert x.shape[1] == k_in, "image size mismatch with prepared params"

    bp = _round_up(max(b, 8), 8)             # sublane-aligned batch
    budget = _vmem_cap_bytes()
    tk = _choose_tk(kp, bp, np_, budget)
    grid = (kp // tk,)

    # Per-call activation pad + bf16 cast (weights are cached / pre-padded).
    if bp == b and kp == k_in:
        xp = x.astype(jnp.bfloat16)
    else:
        xp = jnp.zeros((bp, kp), jnp.bfloat16).at[:b, :k_in].set(
            x.astype(jnp.bfloat16))

    est = _vmem_estimate_bytes(bp, tk, np_)
    vmem_limit = int(min(max(2 * est, 16 * _MIB), budget))

    cost = pl.CostEstimate(
        flops=2 * bp * (kp * HIDDEN + HIDDEN * HIDDEN + HIDDEN * np_),
        transcendentals=HIDDEN,                      # rsqrt per feature
        bytes_accessed=(bp * kp + kp * HIDDEN + HIDDEN * HIDDEN
                        + HIDDEN * np_) * 2
                       + (8 * HIDDEN + np_) * 4
                       + bp * np_ * 4)

    out_full = pl.pallas_call(
        functools.partial(encoder_kernel, true_b=b),
        out_shape=jax.ShapeDtypeStruct((bp, np_), jnp.float32),
        grid_spec=pltpu.PrefetchScalarGridSpec(
            num_scalar_prefetch=0,
            grid=grid,
            in_specs=[
                pl.BlockSpec((bp, tk), lambda k: (0, k)),          # x K-tile
                pl.BlockSpec((tk, HIDDEN), lambda k: (k, 0)),      # w1 K-tile
                pl.BlockSpec((HIDDEN, HIDDEN), lambda k: (0, 0)),  # w2 (resident)
                pl.BlockSpec((HIDDEN, np_), lambda k: (0, 0)),     # w3 (resident)
                pl.BlockSpec((8, HIDDEN), lambda k: (0, 0)),       # packed b1/b2/gamma/beta
                pl.BlockSpec((1, np_), lambda k: (0, 0)),          # b3
            ],
            out_specs=pl.BlockSpec((bp, np_), lambda k: (0, 0)),
            scratch_shapes=[pltpu.VMEM((bp, HIDDEN), jnp.float32)],
        ),
        compiler_params=pltpu.CompilerParams(
            dimension_semantics=("arbitrary",),
            vmem_limit_bytes=vmem_limit),
        cost_estimate=cost,
    )(xp, prepped["w1p"], prepped["w2b"], prepped["w3p"],
      prepped["bias_pack"], prepped["b3p"])

    # Slice away batch / latent padding (lane-dense padded output inside).
    return out_full[:b, :latent]


def init_params(key, in_features, latent_dim):
    """Deterministic PyTorch-Linear-style (uniform +/- 1/sqrt(fan_in)) init."""
    ks = jax.random.split(key, 6)

    def linear(kw, kb, fan_in, fan_out):
        bound = 1.0 / jnp.sqrt(jnp.float32(fan_in))
        w = jax.random.uniform(kw, (fan_in, fan_out), jnp.float32, -bound, bound)
        b = jax.random.uniform(kb, (1, fan_out), jnp.float32, -bound, bound)
        return w, b

    w1, b1 = linear(ks[0], ks[1], in_features, HIDDEN)
    w2, b2 = linear(ks[2], ks[3], HIDDEN, HIDDEN)
    w3, b3 = linear(ks[4], ks[5], HIDDEN, latent_dim)
    gamma = jnp.ones((1, HIDDEN), jnp.float32)   # BatchNorm1d weight init
    beta = jnp.zeros((1, HIDDEN), jnp.float32)   # BatchNorm1d bias init
    return (w1, b1, w2, b2, gamma, beta, w3, b3)


def encoder_reference(img, params):
    """Pure-JAX f32 reference (exact module semantics) for checking."""
    b = img.shape[0]
    x = img.reshape(b, -1)
    w1, b1, w2, b2, gamma, beta, w3, b3 = params
    h = _leaky_relu(x @ w1 + b1)
    h = h @ w2 + b2
    mean = jnp.mean(h, axis=0, keepdims=True)
    var = jnp.mean((h - mean) ** 2, axis=0, keepdims=True)
    h = (h - mean) / jnp.sqrt(var + EPS) * gamma + beta
    h = _leaky_relu(h)
    return h @ w3 + b3


if __name__ == "__main__":
    # Small shapes consistent with the module: channels=1, img_size=16, latent_dim=8.
    B, C, H, W = 4, 1, 16, 16
    LATENT = 8
    in_features = C * H * W

    key = jax.random.PRNGKey(0)
    k_img, k_par = jax.random.split(key)
    img = jax.random.normal(k_img, (B, C, H, W), jnp.float32)
    params = init_params(k_par, in_features, LATENT)
    prepped = prepare_params(params, LATENT)   # one-time: cached padded bf16 weights

    out = jax.block_until_ready(encoder_forward(img, prepped))
    ref = encoder_reference(img, params)

    assert out.shape == (B, LATENT)
    # Tolerance reflects bf16 MXU operands (f32 accumulation) vs. the pure-f32
    # reference, amplified slightly by batch-norm over a batch of 4.
    assert jnp.allclose(out, ref, atol=6e-2, rtol=6e-2), "mismatch vs reference"

    print("KERNEL_OK")
</pallas_src>

<mosaic_0001>
module attributes {stable_mosaic.version = 11 : i64} {
  func.func @encoder_kernel(%arg0: i32, %arg1: memref<8x256xbf16, #tpu.memory_space<vmem>>, %arg2: memref<256x512xbf16, #tpu.memory_space<vmem>>, %arg3: memref<512x512xbf16, #tpu.memory_space<vmem>>, %arg4: memref<512x128xbf16, #tpu.memory_space<vmem>>, %arg5: memref<8x512xf32, #tpu.memory_space<vmem>>, %arg6: memref<1x128xf32, #tpu.memory_space<vmem>>, %arg7: memref<8x128xf32, #tpu.memory_space<vmem>>, %arg8: memref<8x512xf32, #tpu.memory_space<vmem>>) attributes {dimension_semantics = [#tpu.dimension_semantics<arbitrary>], iteration_bounds = array<i64: 1>, scalar_prefetch = 0 : i64, scratch_operands = 1 : i64, tpu.core_type = #tpu.core_type<tc>, window_params = [{transform_indices = @transform_0, window_bounds = array<i64: 8, 256>}, {transform_indices = @transform_1, window_bounds = array<i64: 256, 512>}, {pipeline_mode = #tpu.pipeline_mode<synchronous>, transform_indices = @transform_2, window_bounds = array<i64: 512, 512>}, {pipeline_mode = #tpu.pipeline_mode<synchronous>, transform_indices = @transform_3, window_bounds = array<i64: 512, 128>}, {pipeline_mode = #tpu.pipeline_mode<synchronous>, transform_indices = @transform_4, window_bounds = array<i64: 8, 512>}, {pipeline_mode = #tpu.pipeline_mode<synchronous>, transform_indices = @transform_5, window_bounds = array<i64: 1, 128>}, {pipeline_mode = #tpu.pipeline_mode<synchronous>, transform_indices = @transform_6, window_bounds = array<i64: 8, 128>}]} {
    %c0_i32 = arith.constant 0 : i32
    %0 = arith.cmpi eq, %arg0, %c0_i32 : i32
    %1 = arith.extui %0 : i1 to i32
    %c0_i32_0 = arith.constant 0 : i32
    %2 = arith.cmpi ne, %1, %c0_i32_0 : i32
    scf.if %2 {
      %cst_10 = arith.constant 0.000000e+00 : f32
      %12 = vector.broadcast %cst_10 : f32 to vector<8x512xf32>
      %c0_11 = arith.constant 0 : index
      %c0_12 = arith.constant 0 : index
      %13 = vector.load %arg8[%c0_11, %c0_12] : memref<8x512xf32, #tpu.memory_space<vmem>>, vector<8x512xf32>
      tpu.vector_store %arg8[%c0_11, %c0_12], %12 {strides = array<i32>} : memref<8x512xf32, #tpu.memory_space<vmem>>, vector<8x512xf32>,
    } else {
    }
    %c0 = arith.constant 0 : index
    %c0_1 = arith.constant 0 : index
    %3 = vector.load %arg8[%c0, %c0_1] : memref<8x512xf32, #tpu.memory_space<vmem>>, vector<8x512xf32>
    %c0_2 = arith.constant 0 : index
    %c0_3 = arith.constant 0 : index
    %4 = vector.load %arg1[%c0_2, %c0_3] : memref<8x256xbf16, #tpu.memory_space<vmem>>, vector<8x256xbf16>
    %c0_4 = arith.constant 0 : index
    %c0_5 = arith.constant 0 : index
    %5 = vector.load %arg2[%c0_4, %c0_5] : memref<256x512xbf16, #tpu.memory_space<vmem>>, vector<256x512xbf16>
    %cst = arith.constant dense<0.000000e+00> : vector<8x512xf32>
    %6 = tpu.matmul %4, %5, %cst {dimension_numbers = #tpu.dot_dimension_numbers<[1], [0], [0], [1], [0, 0, 1, 1], [], []>} : vector<8x256xbf16>, vector<256x512xbf16>, vector<8x512xf32> -> vector<8x512xf32>
    %7 = arith.addf %3, %6 : vector<8x512xf32>
    %c0_6 = arith.constant 0 : index
    %c0_7 = arith.constant 0 : index
    %8 = vector.load %arg8[%c0_6, %c0_7] : memref<8x512xf32, #tpu.memory_space<vmem>>, vector<8x512xf32>
    tpu.vector_store %arg8[%c0_6, %c0_7], %7 {strides = array<i32>} : memref<8x512xf32, #tpu.memory_space<vmem>>, vector<8x512xf32>,
    %c0_i32_8 = arith.constant 0 : i32
    %9 = arith.cmpi eq, %arg0, %c0_i32_8 : i32
    %10 = arith.extui %9 : i1 to i32
    %c0_i32_9 = arith.constant 0 : i32
    %11 = arith.cmpi ne, %10, %c0_i32_9 : i32
    scf.if %11 {
      %c0_10 = arith.constant 0 : index
      %c0_11 = arith.constant 0 : index
      %12 = vector.load %arg5[%c0_10, %c0_11] : memref<8x512xf32, #tpu.memory_space<vmem>>, vector<8x512xf32>
      %13 = vector.extract_strided_slice %12 {offsets = [0, 0], sizes = [1, 512], strides = [1, 1]} : vector<8x512xf32> to vector<1x512xf32>
      %14 = vector.extract_strided_slice %12 {offsets = [1, 0], sizes = [1, 512], strides = [1, 1]} : vector<8x512xf32> to vector<1x512xf32>
      %15 = vector.extract_strided_slice %12 {offsets = [2, 0], sizes = [1, 512], strides = [1, 1]} : vector<8x512xf32> to vector<1x512xf32>
      %16 = vector.extract_strided_slice %12 {offsets = [3, 0], sizes = [1, 512], strides = [1, 1]} : vector<8x512xf32> to vector<1x512xf32>
      %c0_12 = arith.constant 0 : index
      %c0_13 = arith.constant 0 : index
      %17 = vector.load %arg8[%c0_12, %c0_13] : memref<8x512xf32, #tpu.memory_space<vmem>>, vector<8x512xf32>
      %18 = vector.broadcast %13 : vector<1x512xf32> to vector<8x512xf32>
      %19 = arith.addf %17, %18 : vector<8x512xf32>
      %cst_14 = arith.constant 0.000000e+00 : f32
      %20 = vector.broadcast %cst_14 : f32 to vector<8x512xf32>
      %21 = arith.cmpf ogt, %19, %20 : vector<8x512xf32>
      %cst_15 = arith.constant 2.000000e-01 : f32
      %22 = vector.broadcast %cst_15 : f32 to vector<8x512xf32>
      %23 = arith.mulf %22, %19 : vector<8x512xf32>
      %24 = arith.select %21, %19, %23 : vector<8x512xi1>, vector<8x512xf32>
      %25 = arith.truncf %24 : vector<8x512xf32> to vector<8x512xbf16>
      %c0_16 = arith.constant 0 : index
      %c0_17 = arith.constant 0 : index
      %26 = vector.load %arg3[%c0_16, %c0_17] : memref<512x512xbf16, #tpu.memory_space<vmem>>, vector<512x512xbf16>
      %cst_18 = arith.constant dense<0.000000e+00> : vector<8x512xf32>
      %27 = tpu.matmul %25, %26, %cst_18 {dimension_numbers = #tpu.dot_dimension_numbers<[1], [0], [0], [1], [0, 0, 1, 1], [], []>} : vector<8x512xbf16>, vector<512x512xbf16>, vector<8x512xf32> -> vector<8x512xf32>
      %28 = vector.broadcast %14 : vector<1x512xf32> to vector<8x512xf32>
      %29 = arith.addf %27, %28 : vector<8x512xf32>
      %30 = tpu.iota {dimensions = array<i32: 0>} : vector<8x512xi32>
      %c4_i32 = arith.constant 4 : i32
      %31 = vector.broadcast %c4_i32 : i32 to vector<8x512xi32>
      %32 = arith.cmpi slt, %30, %31 : vector<8x512xi32>
      %33 = arith.extui %32 : vector<8x512xi1> to vector<8x512xi32>
      %34 = arith.sitofp %33 : vector<8x512xi32> to vector<8x512xf32>
      %35 = arith.mulf %29, %34 : vector<8x512xf32>
      %cst_19 = arith.constant dense<0.000000e+00> : vector<512xf32>
      %36 = vector.multi_reduction <add>, %35, %cst_19 [0] : vector<8x512xf32> to vector<512xf32>
      %37 = vector.shape_cast %36 : vector<512xf32> to vector<1x512xf32>
      %cst_20 = arith.constant 2.500000e-01 : f32
      %38 = vector.broadcast %cst_20 : f32 to vector<1x512xf32>
      %39 = arith.mulf %37, %38 : vector<1x512xf32>
      %40 = vector.broadcast %39 : vector<1x512xf32> to vector<8x512xf32>
      %41 = arith.subf %29, %40 : vector<8x512xf32>
      %42 = arith.mulf %41, %34 : vector<8x512xf32>
      %43 = arith.mulf %42, %42 : vector<8x512xf32>
      %cst_21 = arith.constant dense<0.000000e+00> : vector<512xf32>
      %44 = vector.multi_reduction <add>, %43, %cst_21 [0] : vector<8x512xf32> to vector<512xf32>
      %45 = vector.shape_cast %44 : vector<512xf32> to vector<1x512xf32>
      %cst_22 = arith.constant 2.500000e-01 : f32
      %46 = vector.broadcast %cst_22 : f32 to vector<1x512xf32>
      %47 = arith.mulf %45, %46 : vector<1x512xf32>
      %cst_23 = arith.constant 9.99999974E-6 : f32
      %48 = vector.broadcast %cst_23 : f32 to vector<1x512xf32>
      %49 = arith.addf %47, %48 : vector<1x512xf32>
      %50 = math.rsqrt %49 : vector<1x512xf32>
      %51 = arith.mulf %50, %15 : vector<1x512xf32>
      %52 = vector.broadcast %51 : vector<1x512xf32> to vector<8x512xf32>
      %53 = arith.mulf %42, %52 : vector<8x512xf32>
      %54 = vector.broadcast %16 : vector<1x512xf32> to vector<8x512xf32>
      %55 = arith.addf %53, %54 : vector<8x512xf32>
      %cst_24 = arith.constant 0.000000e+00 : f32
      %56 = vector.broadcast %cst_24 : f32 to vector<8x512xf32>
      %57 = arith.cmpf ogt, %55, %56 : vector<8x512xf32>
      %cst_25 = arith.constant 2.000000e-01 : f32
      %58 = vector.broadcast %cst_25 : f32 to vector<8x512xf32>
      %59 = arith.mulf %58, %55 : vector<8x512xf32>
      %60 = arith.select %57, %55, %59 : vector<8x512xi1>, vector<8x512xf32>
      %61 = arith.truncf %60 : vector<8x512xf32> to vector<8x512xbf16>
      %c0_26 = arith.constant 0 : index
      %c0_27 = arith.constant 0 : index
      %62 = vector.load %arg4[%c0_26, %c0_27] : memref<512x128xbf16, #tpu.memory_space<vmem>>, vector<512x128xbf16>
      %cst_28 = arith.constant dense<0.000000e+00> : vector<8x128xf32>
      %63 = tpu.matmul %61, %62, %cst_28 {dimension_numbers = #tpu.dot_dimension_numbers<[1], [0], [0], [1], [0, 0, 1, 1], [], []>} : vector<8x512xbf16>, vector<512x128xbf16>, vector<8x128xf32> -> vector<8x128xf32>
      %c0_29 = arith.constant 0 : index
      %c0_30 = arith.constant 0 : index
      %64 = vector.load %arg6[%c0_29, %c0_30] : memref<1x128xf32, #tpu.memory_space<vmem>>, vector<1x128xf32>
      %65 = vector.broadcast %64 : vector<1x128xf32> to vector<8x128xf32>
      %66 = arith.addf %63, %65 : vector<8x128xf32>
      %c0_31 = arith.constant 0 : index
      %c0_32 = arith.constant 0 : index
      %67 = vector.load %arg7[%c0_31, %c0_32] : memref<8x128xf32, #tpu.memory_space<vmem>>, vector<8x128xf32>
      tpu.vector_store %arg7[%c0_31, %c0_32], %66 {strides = array<i32>} : memref<8x128xf32, #tpu.memory_space<vmem>>, vector<8x128xf32>,
    } else {
    }
    return
  }
  func.func @transform_0(%arg0: i32) -> (i32, i32) {
    %c0_i32 = arith.constant 0 : i32
    %c0_i32_0 = arith.constant 0 : i32
    return %c0_i32, %arg0 : i32, i32
  }
  func.func @transform_1(%arg0: i32) -> (i32, i32) {
    %c0_i32 = arith.constant 0 : i32
    %c0_i32_0 = arith.constant 0 : i32
    return %arg0, %c0_i32 : i32, i32
  }
  func.func @transform_2(%arg0: i32) -> (i32, i32) {
    %c0_i32 = arith.constant 0 : i32
    %c0_i32_0 = arith.constant 0 : i32
    %c0_i32_1 = arith.constant 0 : i32
    return %c0_i32, %c0_i32_0 : i32, i32
  }
  func.func @transform_3(%arg0: i32) -> (i32, i32) {
    %c0_i32 = arith.constant 0 : i32
    %c0_i32_0 = arith.constant 0 : i32
    %c0_i32_1 = arith.constant 0 : i32
    return %c0_i32, %c0_i32_0 : i32, i32
  }
  func.func @transform_4(%arg0: i32) -> (i32, i32) {
    %c0_i32 = arith.constant 0 : i32
    %c0_i32_0 = arith.constant 0 : i32
    %c0_i32_1 = arith.constant 0 : i32
    return %c0_i32, %c0_i32_0 : i32, i32
  }
  func.func @transform_5(%arg0: i32) -> (i32, i32) {
    %c0_i32 = arith.constant 0 : i32
    %c0_i32_0 = arith.constant 0 : i32
    %c0_i32_1 = arith.constant 0 : i32
    return %c0_i32, %c0_i32_0 : i32, i32
  }
  func.func @transform_6(%arg0: i32) -> (i32, i32) {
    %c0_i32 = arith.constant 0 : i32
    %c0_i32_0 = arith.constant 0 : i32
    %c0_i32_1 = arith.constant 0 : i32
    return %c0_i32, %c0_i32_0 : i32, i32
  }
}

</mosaic_0001>

<llo_original>
// kernel: tpu_custom_call.1
$region0: #{tpu_custom_call.1}
  #allocation0 [shape = 'u32[]', space=smem, size = 0x4, offset = 0x4, fixed_abs, tag = 'smem constant byte address 0x4 - core index']
  #allocation1 [shape = 'u32[144,128]{1,0:T(1,128)}', space=vmem, size = 0x12000, scoped, tag = 'internal scratch']
  #allocation2 [shape = 'f32[8,512]{1,0:T(8,128)}', space=vmem, size = 0x4000, scoped, tag = 'scratch operand']
  %s0 = inlined_call_operand.hbm [shape: bf16[8,256], index: 0, kind: input, shape index: {}]
  %s1 = inlined_call_operand.hbm [shape: bf16[256,512], index: 1, kind: input, shape index: {}]
  %s2 = inlined_call_operand.hbm [shape: bf16[512,512], index: 2, kind: input, shape index: {}]
  %s3 = inlined_call_operand.hbm [shape: bf16[512,128], index: 3, kind: input, shape index: {}]
  %s4 = inlined_call_operand.hbm [shape: f32[8,512], index: 4, kind: input, shape index: {}]
  %s5 = inlined_call_operand.vmem [shape: f32[1,128], index: 5, kind: input, shape index: {}]
  %s6 = inlined_call_operand.hbm [shape: f32[8,128], index: 6, kind: output, shape index: {}]
  %s7 = sld [smem:[#allocation0]]
  $region62: #{tpu_custom_call.1} parent=0
    _
  %s9 = ssub.s32 1, %s7
  %s10 = scalar_select 0, %s9, %s7
  $region1: #{tpu_custom_call.1} parent=0
    #allocation3 [shape = 'u8[4096]{0}', space=vmem, size = 0x1000, scoped, tag = 'input window, operand 0, single buffered']
    #allocation4 [shape = 's32[1]{0}', space=sflag, size = 0x4, scoped, tag = 'scoped memory for tpu_custom_call.1']
    #allocation5 [shape = 's32[1]{0}', space=sflag, size = 0x4, scoped, tag = 'scoped memory for tpu_custom_call.1']
    #allocation6 [shape = 'u8[262144]{0}', space=vmem, size = 0x40000, scoped, tag = 'input window, operand 1, single buffered']
    #allocation7 [shape = 's32[1]{0}', space=sflag, size = 0x4, scoped, tag = 'scoped memory for tpu_custom_call.1']
    #allocation8 [shape = 'u8[524288]{0}', space=vmem, size = 0x80000, scoped, tag = 'input window, operand 2, single buffered']
    #allocation9 [shape = 'u8[131072]{0}', space=vmem, size = 0x20000, scoped, tag = 'input window, operand 3, single buffered']
    #allocation10 [shape = 's32[1]{0}', space=sflag, size = 0x4, scoped, tag = 'scoped memory for tpu_custom_call.1']
    #allocation11 [shape = 'u8[16384]{0}', space=vmem, size = 0x4000, scoped, tag = 'input window, operand 4, single buffered']
    #allocation12 [shape = 'u8[4096]{0}', space=vmem, size = 0x1000, scoped, tag = 'output window, operand 0, single buffered']
    %11 = vsyncpa [#allocation4], 0
    %12 = vsyncpa [#allocation7], 0
    %13 = vsyncpa [#allocation10], 0
    %14 = vsyncpa [#allocation5], 0
    // Predicated region
    $region2: #{tpu_custom_call.1} parent=1 // pred_check
      _
    $region3: #{tpu_custom_call.1} parent=1 // pred_check_branch
      %16 = sbr.rel (0) target = $region5
    $region4: #{tpu_custom_call.1} parent=1 // pred_region
      %s18 = ssub.s32 128, 128
      %19 = vsyncadd [#allocation4], %s18
      %s21 = sshll.u32 [#allocation3], 4
      %s22 = int_to_ptr.vmem [resolvable:$true] %s21
      %24 = dma.hbm_to_vmem [thread:$0]  %s0, 128, %s22, [#allocation4]
    $region5: #{tpu_custom_call.1} parent=1 // pred_fallthru
      _
    // Predicated region
    $region6: #{tpu_custom_call.1} parent=1 // pred_check
      _
    $region7: #{tpu_custom_call.1} parent=1 // pred_check_branch
      %26 = sbr.rel (0) target = $region9
    $region8: #{tpu_custom_call.1} parent=1 // pred_region
      %s28 = ssub.s32 8192, 8192
      %29 = vsyncadd [#allocation7], %s28
      %s30 = sshll.u32 [#allocation6], 4
      %s31 = int_to_ptr.vmem [resolvable:$true] %s30
      %36 = dma.hbm_to_vmem [thread:$0]  %s1, 8192, %s31, [#allocation7], 256, 256, 16
    $region9: #{tpu_custom_call.1} parent=1 // pred_fallthru
      _
    // Predicated region
    $region10: #{tpu_custom_call.1} parent=1 // pred_check
      _
    $region11: #{tpu_custom_call.1} parent=1 // pred_check_branch
      %38 = sbr.rel (0) target = $region13
    $region12: #{tpu_custom_call.1} parent=1 // pred_region
      %s40 = ssub.s32 16384, 16384
      %41 = vsyncadd [#allocation7], %s40
      %s42 = sshll.u32 [#allocation8], 4
      %s43 = int_to_ptr.vmem [resolvable:$true] %s42
      %48 = dma.hbm_to_vmem [thread:$0]  %s2, 16384, %s43, [#allocation7], 256, 256, 16
    $region13: #{tpu_custom_call.1} parent=1 // pred_fallthru
      _
    // Predicated region
    $region14: #{tpu_custom_call.1} parent=1 // pred_check
      _
    $region15: #{tpu_custom_call.1} parent=1 // pred_check_branch
      %50 = sbr.rel (0) target = $region17
    $region16: #{tpu_custom_call.1} parent=1 // pred_region
      %s52 = ssub.s32 4096, 4096
      %53 = vsyncadd [#allocation10], %s52
      %s54 = sshll.u32 [#allocation9], 4
      %s55 = int_to_ptr.vmem [resolvable:$true] %s54
      %60 = dma.hbm_to_vmem [thread:$0]  %s3, 4096, %s55, [#allocation10], 64, 64, 4
    $region17: #{tpu_custom_call.1} parent=1 // pred_fallthru
      _
    // Predicated region
    $region18: #{tpu_custom_call.1} parent=1 // pred_check
      _
    $region19: #{tpu_custom_call.1} parent=1 // pred_check_branch
      %62 = sbr.rel (0) target = $region21
    $region20: #{tpu_custom_call.1} parent=1 // pred_region
      %s64 = ssub.s32 512, 512
      %65 = vsyncadd [#allocation10], %s64
      %s67 = sshll.u32 [#allocation11], 4
      %s68 = int_to_ptr.vmem [resolvable:$true] %s67
      %70 = dma.hbm_to_vmem [thread:$0]  %s4, 512, %s68, [#allocation10]
    $region21: #{tpu_custom_call.1} parent=1 // pred_fallthru
      _
    // Predicated region
    $region22: #{tpu_custom_call.1} parent=1 // pred_check
      _
    $region23: #{tpu_custom_call.1} parent=1 // pred_check_branch
      %72 = sbr.rel (0) target = $region25
    $region24: #{tpu_custom_call.1} parent=1 // pred_region
      _
    $region25: #{tpu_custom_call.1} parent=1 // pred_fallthru
      _
    // Predicated region
    $region26: #{tpu_custom_call.1} parent=1 // pred_check
      _
    $region27: #{tpu_custom_call.1} parent=1 // pred_check_branch
      %74 = sbr.rel (0) target = $region29
    $region28: #{tpu_custom_call.1} parent=1 // pred_region
      %75 = dma.done [#allocation4], 128
    $region29: #{tpu_custom_call.1} parent=1 // pred_fallthru
      _
    // Predicated region
    $region30: #{tpu_custom_call.1} parent=1 // pred_check
      _
    $region31: #{tpu_custom_call.1} parent=1 // pred_check_branch
      %77 = sbr.rel (0) target = $region33
    $region32: #{tpu_custom_call.1} parent=1 // pred_region
      %78 = dma.done [#allocation7], 8192
    $region33: #{tpu_custom_call.1} parent=1 // pred_fallthru
      _
    // Predicated region
    $region34: #{tpu_custom_call.1} parent=1 // pred_check
      _
    $region35: #{tpu_custom_call.1} parent=1 // pred_check_branch
      %80 = sbr.rel (0) target = $region37
    $region36: #{tpu_custom_call.1} parent=1 // pred_region
      %81 = dma.done [#allocation7], 16384
    $region37: #{tpu_custom_call.1} parent=1 // pred_fallthru
      _
    // Predicated region
    $region38: #{tpu_custom_call.1} parent=1 // pred_check
      _
    $region39: #{tpu_custom_call.1} parent=1 // pred_check_branch
      %83 = sbr.rel (0) target = $region41
    $region40: #{tpu_custom_call.1} parent=1 // pred_region
      %84 = dma.done [#allocation10], 4096
    $region41: #{tpu_custom_call.1} parent=1 // pred_fallthru
      _
    // Predicated region
    $region42: #{tpu_custom_call.1} parent=1 // pred_check
      _
    $region43: #{tpu_custom_call.1} parent=1 // pred_check_branch
      %86 = sbr.rel (0) target = $region45
    $region44: #{tpu_custom_call.1} parent=1 // pred_region
      %87 = dma.done [#allocation10], 512
    $region45: #{tpu_custom_call.1} parent=1 // pred_fallthru
      _
    %p89 = scmp.eq.s32.totalorder 0, 0
    // Predicated region
    $region46: #{tpu_custom_call.1} parent=1 // pred_check
      %p90 = pneg %p89
    $region47: #{tpu_custom_call.1} parent=1 // pred_check_branch
      %92 = sbr.rel (%p90) target = $region49
    $region48: #{tpu_custom_call.1} parent=1 // pred_region
      %93 = vst [vmem:[#allocation2] sm:$0xff] 0.0
      %94 = vst [vmem:[#allocation2 + $0x8] sm:$0xff] 0.0
      %95 = vst [vmem:[#allocation2 + $0x10] sm:$0xff] 0.0
      %96 = vst [vmem:[#allocation2 + $0x18] sm:$0xff] 0.0
    $region49: #{tpu_custom_call.1} parent=1 // pred_fallthru
      _
    %v97 = vld [vmem:[#allocation2] sm:$0xff]
    %v98 = vld [vmem:[#allocation2 + $0x8] sm:$0xff]
    %v99 = vld [vmem:[#allocation2 + $0x10] sm:$0xff]
    %v100 = vld [vmem:[#allocation2 + $0x18] sm:$0xff]
    %v101 = vld [vmem:[#allocation3] sm:$0xff]
    %v102 = vld [vmem:[#allocation6] sm:$0xff]
    %v103 = vld [vmem:[#allocation6 + $0x8] sm:$0xff]
    %v104 = vld [vmem:[#allocation6 + $0x10] sm:$0xff]
    %v105 = vld [vmem:[#allocation6 + $0x18] sm:$0xff]
    %v106 = vld [vmem:[#allocation6 + $0x20] sm:$0xff]
    %v107 = vld [vmem:[#allocation6 + $0x28] sm:$0xff]
    %v108 = vld [vmem:[#allocation6 + $0x30] sm:$0xff]
    %v109 = vld [vmem:[#allocation6 + $0x38] sm:$0xff]
    %v110 = vld [vmem:[#allocation6 + $0x40] sm:$0xff]
    %v111 = vld [vmem:[#allocation6 + $0x48] sm:$0xff]
    %v112 = vld [vmem:[#allocation6 + $0x50] sm:$0xff]
    %v113 = vld [vmem:[#allocation6 + $0x58] sm:$0xff]
    %v114 = vld [vmem:[#allocation6 + $0x60] sm:$0xff]
    %v115 = vld [vmem:[#allocation6 + $0x68] sm:$0xff]
    %v116 = vld [vmem:[#allocation6 + $0x70] sm:$0xff]
    %v117 = vld [vmem:[#allocation6 + $0x78] sm:$0xff]
    %v118 = vld [vmem:[#allocation6 + $0x80] sm:$0xff]
    %v119 = vld [vmem:[#allocation6 + $0x88] sm:$0xff]
    %v120 = vld [vmem:[#allocation6 + $0x90] sm:$0xff]
    %v121 = vld [vmem:[#allocation6 + $0x98] sm:$0xff]
    %v122 = vld [vmem:[#allocation6 + $0xa0] sm:$0xff]
    %v123 = vld [vmem:[#allocation6 + $0xa8] sm:$0xff]
    %v124 = vld [vmem:[#allocation6 + $0xb0] sm:$0xff]
    %v125 = vld [vmem:[#allocation6 + $0xb8] sm:$0xff]
    %v126 = vld [vmem:[#allocation6 + $0xc0] sm:$0xff]
    %v127 = vld [vmem:[#allocation6 + $0xc8] sm:$0xff]
    %v128 = vld [vmem:[#allocation6 + $0xd0] sm:$0xff]
    %v129 = vld [vmem:[#allocation6 + $0xd8] sm:$0xff]
    %v130 = vld [vmem:[#allocation6 + $0xe0] sm:$0xff]
    %v131 = vld [vmem:[#allocation6 + $0xe8] sm:$0xff]
    %v132 = vld [vmem:[#allocation6 + $0xf0] sm:$0xff]
    %v133 = vld [vmem:[#allocation6 + $0xf8] sm:$0xff]
    %v134 = vld [vmem:[#allocation6 + $0x100] sm:$0xff]
    %v135 = vld [vmem:[#allocation6 + $0x108] sm:$0xff]
    %v136 = vld [vmem:[#allocation6 + $0x110] sm:$0xff]
    %v137 = vld [vmem:[#allocation6 + $0x118] sm:$0xff]
    %v138 = vld [vmem:[#allocation6 + $0x120] sm:$0xff]
    %v139 = vld [vmem:[#allocation6 + $0x128] sm:$0xff]
    %v140 = vld [vmem:[#allocation6 + $0x130] sm:$0xff]
    %v141 = vld [vmem:[#allocation6 + $0x138] sm:$0xff]
    %v142 = vld [vmem:[#allocation6 + $0x140] sm:$0xff]
    %v143 = vld [vmem:[#allocation6 + $0x148] sm:$0xff]
    %v144 = vld [vmem:[#allocation6 + $0x150] sm:$0xff]
    %v145 = vld [vmem:[#allocation6 + $0x158] sm:$0xff]
    %v146 = vld [vmem:[#allocation6 + $0x160] sm:$0xff]
    %v147 = vld [vmem:[#allocation6 + $0x168] sm:$0xff]
    %v148 = vld [vmem:[#allocation6 + $0x170] sm:$0xff]
    %v149 = vld [vmem:[#allocation6 + $0x178] sm:$0xff]
    %v150 = vld [vmem:[#allocation6 + $0x180] sm:$0xff]
    %v151 = vld [vmem:[#allocation6 + $0x188] sm:$0xff]
    %v152 = vld [vmem:[#allocation6 + $0x190] sm:$0xff]
    %v153 = vld [vmem:[#allocation6 + $0x198] sm:$0xff]
    %v154 = vld [vmem:[#allocation6 + $0x1a0] sm:$0xff]
    %v155 = vld [vmem:[#allocation6 + $0x1a8] sm:$0xff]
    %v156 = vld [vmem:[#allocation6 + $0x1b0] sm:$0xff]
    %v157 = vld [vmem:[#allocation6 + $0x1b8] sm:$0xff]
    %v158 = vld [vmem:[#allocation6 + $0x1c0] sm:$0xff]
    %v159 = vld [vmem:[#allocation6 + $0x1c8] sm:$0xff]
    %v160 = vld [vmem:[#allocation6 + $0x1d0] sm:$0xff]
    %v161 = vld [vmem:[#allocation6 + $0x1d8] sm:$0xff]
    %v162 = vld [vmem:[#allocation6 + $0x1e0] sm:$0xff]
    %v163 = vld [vmem:[#allocation6 + $0x1e8] sm:$0xff]
    %v164 = vld [vmem:[#allocation6 + $0x1f0] sm:$0xff]
    %v165 = vld [vmem:[#allocation6 + $0x1f8] sm:$0xff]
    %v167 = vunpack.c.l.b16 %v101
    %v168 = vunpack.c.h.b16 %v101
    %v169 = vpack.c.b16 %v167, %v167
    %v170 = vpack.c.b16 %v168, %v168
    %v237 = vunpack.c.l.b16 %v102
    %v238 = vunpack.c.h.b16 %v102
    %v239 = vunpack.c.l.b16 %v103
    %v240 = vunpack.c.h.b16 %v103
    %v241 = vunpack.c.l.b16 %v104
    %v242 = vunpack.c.h.b16 %v104
    %v243 = vunpack.c.l.b16 %v105
    %v244 = vunpack.c.h.b16 %v105
    %v245 = vunpack.c.l.b16 %v106
    %v246 = vunpack.c.h.b16 %v106
    %v247 = vunpack.c.l.b16 %v107
    %v248 = vunpack.c.h.b16 %v107
    %v249 = vunpack.c.l.b16 %v108
    %v250 = vunpack.c.h.b16 %v108
    %v251 = vunpack.c.l.b16 %v109
    %v252 = vunpack.c.h.b16 %v109
    %v253 = vunpack.c.l.b16 %v110
    %v254 = vunpack.c.h.b16 %v110
    %v255 = vunpack.c.l.b16 %v111
    %v256 = vunpack.c.h.b16 %v111
    %v257 = vunpack.c.l.b16 %v112
    %v258 = vunpack.c.h.b16 %v112
    %v259 = vunpack.c.l.b16 %v113
    %v260 = vunpack.c.h.b16 %v113
    %v261 = vunpack.c.l.b16 %v114
    %v262 = vunpack.c.h.b16 %v114
    %v263 = vunpack.c.l.b16 %v115
    %v264 = vunpack.c.h.b16 %v115
    %v265 = vunpack.c.l.b16 %v116
    %v266 = vunpack.c.h.b16 %v116
    %v267 = vunpack.c.l.b16 %v117
    %v268 = vunpack.c.h.b16 %v117
    %v269 = vunpack.c.l.b16 %v118
    %v270 = vunpack.c.h.b16 %v118
    %v271 = vunpack.c.l.b16 %v119
    %v272 = vunpack.c.h.b16 %v119
    %v273 = vunpack.c.l.b16 %v120
    %v274 = vunpack.c.h.b16 %v120
    %v275 = vunpack.c.l.b16 %v121
    %v276 = vunpack.c.h.b16 %v121
    %v277 = vunpack.c.l.b16 %v122
    %v278 = vunpack.c.h.b16 %v122
    %v279 = vunpack.c.l.b16 %v123
    %v280 = vunpack.c.h.b16 %v123
    %v281 = vunpack.c.l.b16 %v124
    %v282 = vunpack.c.h.b16 %v124
    %v283 = vunpack.c.l.b16 %v125
    %v284 = vunpack.c.h.b16 %v125
    %v285 = vunpack.c.l.b16 %v126
    %v286 = vunpack.c.h.b16 %v126
    %v287 = vunpack.c.l.b16 %v127
    %v288 = vunpack.c.h.b16 %v127
    %v289 = vunpack.c.l.b16 %v128
    %v290 = vunpack.c.h.b16 %v128
    %v291 = vunpack.c.l.b16 %v129
    %v292 = vunpack.c.h.b16 %v129
    %v293 = vunpack.c.l.b16 %v130
    %v294 = vunpack.c.h.b16 %v130
    %v295 = vunpack.c.l.b16 %v131
    %v296 = vunpack.c.h.b16 %v131
    %v297 = vunpack.c.l.b16 %v132
    %v298 = vunpack.c.h.b16 %v132
    %v299 = vunpack.c.l.b16 %v133
    %v300 = vunpack.c.h.b16 %v133
    %v301 = vunpack.c.l.b16 %v134
    %v302 = vunpack.c.h.b16 %v134
    %v303 = vunpack.c.l.b16 %v135
    %v304 = vunpack.c.h.b16 %v135
    %v305 = vunpack.c.l.b16 %v136
    %v306 = vunpack.c.h.b16 %v136
    %v307 = vunpack.c.l.b16 %v137
    %v308 = vunpack.c.h.b16 %v137
    %v309 = vunpack.c.l.b16 %v138
    %v310 = vunpack.c.h.b16 %v138
    %v311 = vunpack.c.l.b16 %v139
    %v312 = vunpack.c.h.b16 %v139
    %v313 = vunpack.c.l.b16 %v140
    %v314 = vunpack.c.h.b16 %v140
    %v315 = vunpack.c.l.b16 %v141
    %v316 = vunpack.c.h.b16 %v141
    %v317 = vunpack.c.l.b16 %v142
    %v318 = vunpack.c.h.b16 %v142
    %v319 = vunpack.c.l.b16 %v143
    %v320 = vunpack.c.h.b16 %v143
    %v321 = vunpack.c.l.b16 %v144
    %v322 = vunpack.c.h.b16 %v144
    %v323 = vunpack.c.l.b16 %v145
    %v324 = vunpack.c.h.b16 %v145
    %v325 = vunpack.c.l.b16 %v146
    %v326 = vunpack.c.h.b16 %v146
    %v327 = vunpack.c.l.b16 %v147
    %v328 = vunpack.c.h.b16 %v147
    %v329 = vunpack.c.l.b16 %v148
    %v330 = vunpack.c.h.b16 %v148
    %v331 = vunpack.c.l.b16 %v149
    %v332 = vunpack.c.h.b16 %v149
    %v333 = vunpack.c.l.b16 %v150
    %v334 = vunpack.c.h.b16 %v150
    %v335 = vunpack.c.l.b16 %v151
    %v336 = vunpack.c.h.b16 %v151
    %v337 = vunpack.c.l.b16 %v152
    %v338 = vunpack.c.h.b16 %v152
    %v339 = vunpack.c.l.b16 %v153
    %v340 = vunpack.c.h.b16 %v153
    %v341 = vunpack.c.l.b16 %v154
    %v342 = vunpack.c.h.b16 %v154
    %v343 = vunpack.c.l.b16 %v155
    %v344 = vunpack.c.h.b16 %v155
    %v345 = vunpack.c.l.b16 %v156
    %v346 = vunpack.c.h.b16 %v156
    %v347 = vunpack.c.l.b16 %v157
    %v348 = vunpack.c.h.b16 %v157
    %v349 = vunpack.c.l.b16 %v158
    %v350 = vunpack.c.h.b16 %v158
    %v351 = vunpack.c.l.b16 %v159
    %v352 = vunpack.c.h.b16 %v159
    %v353 = vunpack.c.l.b16 %v160
    %v354 = vunpack.c.h.b16 %v160
    %v355 = vunpack.c.l.b16 %v161
    %v356 = vunpack.c.h.b16 %v161
    %v357 = vunpack.c.l.b16 %v162
    %v358 = vunpack.c.h.b16 %v162
    %v359 = vunpack.c.l.b16 %v163
    %v360 = vunpack.c.h.b16 %v163
    %v361 = vunpack.c.l.b16 %v164
    %v362 = vunpack.c.h.b16 %v164
    %v363 = vunpack.c.l.b16 %v165
    %v364 = vunpack.c.h.b16 %v165
    %v365 = vpack.c.b16 %v241, %v237
    %v366 = vpack.c.b16 %v242, %v238
    %v367 = vpack.c.b16 %v243, %v239
    %v368 = vpack.c.b16 %v244, %v240
    %v369 = vpack.c.b16 %v249, %v245
    %v370 = vpack.c.b16 %v250, %v246
    %v371 = vpack.c.b16 %v251, %v247
    %v372 = vpack.c.b16 %v252, %v248
    %v373 = vpack.c.b16 %v257, %v253
    %v374 = vpack.c.b16 %v258, %v254
    %v375 = vpack.c.b16 %v259, %v255
    %v376 = vpack.c.b16 %v260, %v256
    %v377 = vpack.c.b16 %v265, %v261
    %v378 = vpack.c.b16 %v266, %v262
    %v379 = vpack.c.b16 %v267, %v263
    %v380 = vpack.c.b16 %v268, %v264
    %v381 = vpack.c.b16 %v273, %v269
    %v382 = vpack.c.b16 %v274, %v270
    %v383 = vpack.c.b16 %v275, %v271
    %v384 = vpack.c.b16 %v276, %v272
    %v385 = vpack.c.b16 %v281, %v277
    %v386 = vpack.c.b16 %v282, %v278
    %v387 = vpack.c.b16 %v283, %v279
    %v388 = vpack.c.b16 %v284, %v280
    %v389 = vpack.c.b16 %v289, %v285
    %v390 = vpack.c.b16 %v290, %v286
    %v391 = vpack.c.b16 %v291, %v287
    %v392 = vpack.c.b16 %v292, %v288
    %v393 = vpack.c.b16 %v297, %v293
    %v394 = vpack.c.b16 %v298, %v294
    %v395 = vpack.c.b16 %v299, %v295
    %v396 = vpack.c.b16 %v300, %v296
    %v397 = vpack.c.b16 %v305, %v301
    %v398 = vpack.c.b16 %v306, %v302
    %v399 = vpack.c.b16 %v307, %v303
    %v400 = vpack.c.b16 %v308, %v304
    %v401 = vpack.c.b16 %v313, %v309
    %v402 = vpack.c.b16 %v314, %v310
    %v403 = vpack.c.b16 %v315, %v311
    %v404 = vpack.c.b16 %v316, %v312
    %v405 = vpack.c.b16 %v321, %v317
    %v406 = vpack.c.b16 %v322, %v318
    %v407 = vpack.c.b16 %v323, %v319
    %v408 = vpack.c.b16 %v324, %v320
    %v409 = vpack.c.b16 %v329, %v325
    %v410 = vpack.c.b16 %v330, %v326
    %v411 = vpack.c.b16 %v331, %v327
    %v412 = vpack.c.b16 %v332, %v328
    %v413 = vpack.c.b16 %v337, %v333
    %v414 = vpack.c.b16 %v338, %v334
    %v415 = vpack.c.b16 %v339, %v335
    %v416 = vpack.c.b16 %v340, %v336
    %v417 = vpack.c.b16 %v345, %v341
    %v418 = vpack.c.b16 %v346, %v342
    %v419 = vpack.c.b16 %v347, %v343
    %v420 = vpack.c.b16 %v348, %v344
    %v421 = vpack.c.b16 %v353, %v349
    %v422 = vpack.c.b16 %v354, %v350
    %v423 = vpack.c.b16 %v355, %v351
    %v424 = vpack.c.b16 %v356, %v352
    %v425 = vpack.c.b16 %v361, %v357
    %v426 = vpack.c.b16 %v362, %v358
    %v427 = vpack.c.b16 %v363, %v359
    %v428 = vpack.c.b16 %v364, %v360
    %493 = vmatprep.subr.bf16.mxu0 %v394
    %494 = vmatpush1.bf16.msra.mxu0 %v393
    %495 = vmatprep.subr.bf16.mxu0 %v390
    %496 = vmatpush1.bf16.msra.mxu0 %v389
    %497 = vmatprep.subr.bf16.mxu0 %v386
    %498 = vmatpush1.bf16.msra.mxu0 %v385
    %499 = vmatprep.subr.bf16.mxu0 %v382
    %500 = vmatpush1.bf16.msra.mxu0 %v381
    %501 = vmatprep.subr.bf16.mxu0 %v378
    %502 = vmatpush1.bf16.msra.mxu0 %v377
    %503 = vmatprep.subr.bf16.mxu0 %v374
    %504 = vmatpush1.bf16.msra.mxu0 %v373
    %505 = vmatprep.subr.bf16.mxu0 %v370
    %506 = vmatpush1.bf16.msra.mxu0 %v369
    %507 = vmatprep.subr.bf16.mxu0 %v366
    %508 = vmatpush1.bf16.msra.mxu0 %v365
    %509 = vmatprep.subr.bf16.mxu0 %v426
    %510 = vmatpush2.bf16.msra.mxu0 %v425
    %511 = vmatprep.subr.bf16.mxu0 %v422
    %512 = vmatpush2.bf16.msra.mxu0 %v421
    %513 = vmatprep.subr.bf16.mxu0 %v418
    %514 = vmatpush2.bf16.msra.mxu0 %v417
    %515 = vmatprep.subr.bf16.mxu0 %v414
    %516 = vmatpush2.bf16.msra.mxu0 %v413
    %517 = vmatprep.subr.bf16.mxu0 %v410
    %518 = vmatpush2.bf16.msra.mxu0 %v409
    %519 = vmatprep.subr.bf16.mxu0 %v406
    %520 = vmatpush2.bf16.msra.mxu0 %v405
    %521 = vmatprep.subr.bf16.mxu0 %v402
    %522 = vmatpush2.bf16.msra.mxu0 %v401
    %523 = vmatprep.subr.bf16.mxu0 %v398
    %524 = vmatpush2.bf16.msra.mxu0 %v397
    %525 = vmatprep.mubr.bf16.mxu0 %v170
    %526 = vmatmul.mubr.bf16.gmra.mxu0 %v169
    %v527 = vpop.f32.mrf.mxu0
    %v528 = vadd.f32 0.0, %v527
    %v529 = vpop.f32.mrf.mxu0
    %v530 = vadd.f32 0.0, %v529
    %v531 = vpop.f32.mrf.mxu0
    %v532 = vpop.f32.mrf.mxu0
    %533 = vdwg.mxu0
    %534 = vmatprep.subr.bf16.mxu0 %v396
    %535 = vmatpush1.bf16.msra.mxu0 %v395
    %536 = vmatprep.subr.bf16.mxu0 %v392
    %537 = vmatpush1.bf16.msra.mxu0 %v391
    %538 = vmatprep.subr.bf16.mxu0 %v388
    %539 = vmatpush1.bf16.msra.mxu0 %v387
    %540 = vmatprep.subr.bf16.mxu0 %v384
    %541 = vmatpush1.bf16.msra.mxu0 %v383
    %542 = vmatprep.subr.bf16.mxu0 %v380
    %543 = vmatpush1.bf16.msra.mxu0 %v379
    %544 = vmatprep.subr.bf16.mxu0 %v376
    %545 = vmatpush1.bf16.msra.mxu0 %v375
    %546 = vmatprep.subr.bf16.mxu0 %v372
    %547 = vmatpush1.bf16.msra.mxu0 %v371
    %548 = vmatprep.subr.bf16.mxu0 %v368
    %549 = vmatpush1.bf16.msra.mxu0 %v367
    %550 = vmatprep.subr.bf16.mxu0 %v428
    %551 = vmatpush2.bf16.msra.mxu0 %v427
    %552 = vmatprep.subr.bf16.mxu0 %v424
    %553 = vmatpush2.bf16.msra.mxu0 %v423
    %554 = vmatprep.subr.bf16.mxu0 %v420
    %555 = vmatpush2.bf16.msra.mxu0 %v419
    %556 = vmatprep.subr.bf16.mxu0 %v416
    %557 = vmatpush2.bf16.msra.mxu0 %v415
    %558 = vmatprep.subr.bf16.mxu0 %v412
    %559 = vmatpush2.bf16.msra.mxu0 %v411
    %560 = vmatprep.subr.bf16.mxu0 %v408
    %561 = vmatpush2.bf16.msra.mxu0 %v407
    %562 = vmatprep.subr.bf16.mxu0 %v404
    %563 = vmatpush2.bf16.msra.mxu0 %v403
    %564 = vmatprep.subr.bf16.mxu0 %v400
    %565 = vmatpush2.bf16.msra.mxu0 %v399
    %566 = vmatprep.mubr.bf16.mxu0 %v170
    %567 = vmatmul.mubr.bf16.gmra.mxu0 %v169
    %v568 = vpop.f32.mrf.mxu0
    %v569 = vadd.f32 0.0, %v568
    %v570 = vpop.f32.mrf.mxu0
    %v571 = vadd.f32 0.0, %v570
    %v572 = vpop.f32.mrf.mxu0
    %v573 = vpop.f32.mrf.mxu0
    %574 = vdwg.mxu0
    %v575 = vadd.f32 %v97, %v528
    %v576 = vadd.f32 %v98, %v530
    %v577 = vadd.f32 %v99, %v569
    %v578 = vadd.f32 %v100, %v571
    %579 = vst [vmem:[#allocation2] sm:$0xff] %v575
    %580 = vst [vmem:[#allocation2 + $0x8] sm:$0xff] %v576
    %581 = vst [vmem:[#allocation2 + $0x10] sm:$0xff] %v577
    %582 = vst [vmem:[#allocation2 + $0x18] sm:$0xff] %v578
    // Predicated region
    $region50: #{tpu_custom_call.1} parent=1 // pred_check
      %p583 = pneg %p89
    $region51: #{tpu_custom_call.1} parent=1 // pred_check_branch
      %585 = sbr.rel (%p583) target = $region53
    $region52: #{tpu_custom_call.1} parent=1 // pred_region
      %v586 = vld [vmem:[#allocation11] sm:$0xff]
      %v587 = vld [vmem:[#allocation11 + $0x8] sm:$0xff]
      %v588 = vld [vmem:[#allocation11 + $0x10] sm:$0xff]
      %v589 = vld [vmem:[#allocation11 + $0x18] sm:$0xff]
      %v590 = vld [vmem:[#allocation2] sm:$0xff]
      %v591 = vld [vmem:[#allocation2 + $0x8] sm:$0xff]
      %v592 = vld [vmem:[#allocation2 + $0x10] sm:$0xff]
      %v593 = vld [vmem:[#allocation2 + $0x18] sm:$0xff]
      %v594 = vlaneseq
      %v595 = vshrl.u32 %v594, 7
      %v596 = vsub.s32 0, %v595
      %v597 = vrot.slane %v586, %v596
      %v598 = vlaneseq
      %v599 = vshrl.u32 %v598, 7
      %v600 = vsub.s32 0, %v599
      %v601 = vrot.slane %v587, %v600
      %v602 = vlaneseq
      %v603 = vshrl.u32 %v602, 7
      %v604 = vsub.s32 0, %v603
      %v605 = vrot.slane %v588, %v604
      %v606 = vlaneseq
      %v607 = vshrl.u32 %v606, 7
      %v608 = vsub.s32 0, %v607
      %v609 = vrot.slane %v589, %v608
      %v610 = vadd.f32 %v590, %v597
      %v611 = vadd.f32 %v591, %v601
      %v612 = vadd.f32 %v592, %v605
      %v613 = vadd.f32 %v593, %v609
      %vm614 = vcmp.gt.f32.partialorder %v610, 0.0
      %vm615 = vcmp.gt.f32.partialorder %v611, 0.0
      %vm616 = vcmp.gt.f32.partialorder %v612, 0.0
      %vm617 = vcmp.gt.f32.partialorder %v613, 0.0
      %v618 = vmul.f32 %v610, 0.2
      %v619 = vmul.f32 %v611, 0.2
      %v620 = vmul.f32 %v612, 0.2
      %v621 = vmul.f32 %v613, 0.2
      %v622 = vsel %vm614, %v610, %v618
      %v623 = vsel %vm615, %v611, %v619
      %v624 = vsel %vm616, %v612, %v620
      %v625 = vsel %vm617, %v613, %v621
      %v626 = vpack.c.bf16 %v622, %v622
      %v627 = vpack.c.bf16 %v623, %v623
      %v628 = vpack.c.bf16 %v624, %v624
      %v629 = vpack.c.bf16 %v625, %v625
      %v630 = vld [vmem:[#allocation8] sm:$0xff]
      %v631 = vld [vmem:[#allocation8 + $0x8] sm:$0xff]
      %v632 = vld [vmem:[#allocation8 + $0x10] sm:$0xff]
      %v633 = vld [vmem:[#allocation8 + $0x18] sm:$0xff]
      %v634 = vld [vmem:[#allocation8 + $0x20] sm:$0xff]
      %v635 = vld [vmem:[#allocation8 + $0x28] sm:$0xff]
      %v636 = vld [vmem:[#allocation8 + $0x30] sm:$0xff]
      %v637 = vld [vmem:[#allocation8 + $0x38] sm:$0xff]
      %v638 = vld [vmem:[#allocation8 + $0x40] sm:$0xff]
      %v639 = vld [vmem:[#allocation8 + $0x48] sm:$0xff]
      %v640 = vld [vmem:[#allocation8 + $0x50] sm:$0xff]
      %v641 = vld [vmem:[#allocation8 + $0x58] sm:$0xff]
      %v642 = vld [vmem:[#allocation8 + $0x60] sm:$0xff]
      %v643 = vld [vmem:[#allocation8 + $0x68] sm:$0xff]
      %v644 = vld [vmem:[#allocation8 + $0x70] sm:$0xff]
      %v645 = vld [vmem:[#allocation8 + $0x78] sm:$0xff]
      %v646 = vld [vmem:[#allocation8 + $0x80] sm:$0xff]
      %v647 = vld [vmem:[#allocation8 + $0x88] sm:$0xff]
      %v648 = vld [vmem:[#allocation8 + $0x90] sm:$0xff]
      %v649 = vld [vmem:[#allocation8 + $0x98] sm:$0xff]
      %v650 = vld [vmem:[#allocation8 + $0xa0] sm:$0xff]
      %v651 = vld [vmem:[#allocation8 + $0xa8] sm:$0xff]
      %v652 = vld [vmem:[#allocation8 + $0xb0] sm:$0xff]
      %v653 = vld [vmem:[#allocation8 + $0xb8] sm:$0xff]
      %v654 = vld [vmem:[#allocation8 + $0xc0] sm:$0xff]
      %v655 = vld [vmem:[#allocation8 + $0xc8] sm:$0xff]
      %v656 = vld [vmem:[#allocation8 + $0xd0] sm:$0xff]
      %v657 = vld [vmem:[#allocation8 + $0xd8] sm:$0xff]
      %v658 = vld [vmem:[#allocation8 + $0xe0] sm:$0xff]
      %v659 = vld [vmem:[#allocation8 + $0xe8] sm:$0xff]
      %v660 = vld [vmem:[#allocation8 + $0xf0] sm:$0xff]
      %v661 = vld [vmem:[#allocation8 + $0xf8] sm:$0xff]
      %v662 = vld [vmem:[#allocation8 + $0x100] sm:$0xff]
      %v663 = vld [vmem:[#allocation8 + $0x108] sm:$0xff]
      %v664 = vld [vmem:[#allocation8 + $0x110] sm:$0xff]
      %v665 = vld [vmem:[#allocation8 + $0x118] sm:$0xff]
      %v666 = vld [vmem:[#allocation8 + $0x120] sm:$0xff]
      %v667 = vld [vmem:[#allocation8 + $0x128] sm:$0xff]
      %v668 = vld [vmem:[#allocation8 + $0x130] sm:$0xff]
      %v669 = vld [vmem:[#allocation8 + $0x138] sm:$0xff]
      %v670 = vld [vmem:[#allocation8 + $0x140] sm:$0xff]
      %v671 = vld [vmem:[#allocation8 + $0x148] sm:$0xff]
      %v672 = vld [vmem:[#allocation8 + $0x150] sm:$0xff]
      %v673 = vld [vmem:[#allocation8 + $0x158] sm:$0xff]
      %v674 = vld [vmem:[#allocation8 + $0x160] sm:$0xff]
      %v675 = vld [vmem:[#allocation8 + $0x168] sm:$0xff]
      %v676 = vld [vmem:[#allocation8 + $0x170] sm:$0xff]
      %v677 = vld [vmem:[#allocation8 + $0x178] sm:$0xff]
      %v678 = vld [vmem:[#allocation8 + $0x180] sm:$0xff]
      %v679 = vld [vmem:[#allocation8 + $0x188] sm:$0xff]
      %v680 = vld [vmem:[#allocation8 + $0x190] sm:$0xff]
      %v681 = vld [vmem:[#allocation8 + $0x198] sm:$0xff]
      %v682 = vld [vmem:[#allocation8 + $0x1a0] sm:$0xff]
      %v683 = vld [vmem:[#allocation8 + $0x1a8] sm:$0xff]
      %v684 = vld [vmem:[#allocation8 + $0x1b0] sm:$0xff]
      %v685 = vld [vmem:[#allocation8 + $0x1b8] sm:$0xff]
      %v686 = vld [vmem:[#allocation8 + $0x1c0] sm:$0xff]
      %v687 = vld [vmem:[#allocation8 + $0x1c8] sm:$0xff]
      %v688 = vld [vmem:[#allocation8 + $0x1d0] sm:$0xff]
      %v689 = vld [vmem:[#allocation8 + $0x1d8] sm:$0xff]
      %v690 = vld [vmem:[#allocation8 + $0x1e0] sm:$0xff]
      %v691 = vld [vmem:[#allocation8 + $0x1e8] sm:$0xff]
      %v692 = vld [vmem:[#allocation8 + $0x1f0] sm:$0xff]
      %v693 = vld [vmem:[#allocation8 + $0x1f8] sm:$0xff]
      %v694 = vld [vmem:[#allocation8 + $0x200] sm:$0xff]
      %v695 = vld [vmem:[#allocation8 + $0x208] sm:$0xff]
      %v696 = vld [vmem:[#allocation8 + $0x210] sm:$0xff]
      %v697 = vld [vmem:[#allocation8 + $0x218] sm:$0xff]
      %v698 = vld [vmem:[#allocation8 + $0x220] sm:$0xff]
      %v699 = vld [vmem:[#allocation8 + $0x228] sm:$0xff]
      %v700 = vld [vmem:[#allocation8 + $0x230] sm:$0xff]
      %v701 = vld [vmem:[#allocation8 + $0x238] sm:$0xff]
      %v702 = vld [vmem:[#allocation8 + $0x240] sm:$0xff]
      %v703 = vld [vmem:[#allocation8 + $0x248] sm:$0xff]
      %v704 = vld [vmem:[#allocation8 + $0x250] sm:$0xff]
      %v705 = vld [vmem:[#allocation8 + $0x258] sm:$0xff]
      %v706 = vld [vmem:[#allocation8 + $0x260] sm:$0xff]
      %v707 = vld [vmem:[#allocation8 + $0x268] sm:$0xff]
      %v708 = vld [vmem:[#allocation8 + $0x270] sm:$0xff]
      %v709 = vld [vmem:[#allocation8 + $0x278] sm:$0xff]
      %v710 = vld [vmem:[#allocation8 + $0x280] sm:$0xff]
      %v711 = vld [vmem:[#allocation8 + $0x288] sm:$0xff]
      %v712 = vld [vmem:[#allocation8 + $0x290] sm:$0xff]
      %v713 = vld [vmem:[#allocation8 + $0x298] sm:$0xff]
      %v714 = vld [vmem:[#allocation8 + $0x2a0] sm:$0xff]
      %v715 = vld [vmem:[#allocation8 + $0x2a8] sm:$0xff]
      %v716 = vld [vmem:[#allocation8 + $0x2b0] sm:$0xff]
      %v717 = vld [vmem:[#allocation8 + $0x2b8] sm:$0xff]
      %v718 = vld [vmem:[#allocation8 + $0x2c0] sm:$0xff]
      %v719 = vld [vmem:[#allocation8 + $0x2c8] sm:$0xff]
      %v720 = vld [vmem:[#allocation8 + $0x2d0] sm:$0xff]
      %v721 = vld [vmem:[#allocation8 + $0x2d8] sm:$0xff]
      %v722 = vld [vmem:[#allocation8 + $0x2e0] sm:$0xff]
      %v723 = vld [vmem:[#allocation8 + $0x2e8] sm:$0xff]
      %v724 = vld [vmem:[#allocation8 + $0x2f0] sm:$0xff]
      %v725 = vld [vmem:[#allocation8 + $0x2f8] sm:$0xff]
      %v726 = vld [vmem:[#allocation8 + $0x300] sm:$0xff]
      %v727 = vld [vmem:[#allocation8 + $0x308] sm:$0xff]
      %v728 = vld [vmem:[#allocation8 + $0x310] sm:$0xff]
      %v729 = vld [vmem:[#allocation8 + $0x318] sm:$0xff]
      %v730 = vld [vmem:[#allocation8 + $0x320] sm:$0xff]
      %v731 = vld [vmem:[#allocation8 + $0x328] sm:$0xff]
      %v732 = vld [vmem:[#allocation8 + $0x330] sm:$0xff]
      %v733 = vld [vmem:[#allocation8 + $0x338] sm:$0xff]
      %v734 = vld [vmem:[#allocation8 + $0x340] sm:$0xff]
      %v735 = vld [vmem:[#allocation8 + $0x348] sm:$0xff]
      %v736 = vld [vmem:[#allocation8 + $0x350] sm:$0xff]
      %v737 = vld [vmem:[#allocation8 + $0x358] sm:$0xff]
      %v738 = vld [vmem:[#allocation8 + $0x360] sm:$0xff]
      %v739 = vld [vmem:[#allocation8 + $0x368] sm:$0xff]
      %v740 = vld [vmem:[#allocation8 + $0x370] sm:$0xff]
      %v741 = vld [vmem:[#allocation8 + $0x378] sm:$0xff]
      %v742 = vld [vmem:[#allocation8 + $0x380] sm:$0xff]
      %v743 = vld [vmem:[#allocation8 + $0x388] sm:$0xff]
      %v744 = vld [vmem:[#allocation8 + $0x390] sm:$0xff]
      %v745 = vld [vmem:[#allocation8 + $0x398] sm:$0xff]
      %v746 = vld [vmem:[#allocation8 + $0x3a0] sm:$0xff]
      %v747 = vld [vmem:[#allocation8 + $0x3a8] sm:$0xff]
      %v748 = vld [vmem:[#allocation8 + $0x3b0] sm:$0xff]
      %v749 = vld [vmem:[#allocation8 + $0x3b8] sm:$0xff]
      %v750 = vld [vmem:[#allocation8 + $0x3c0] sm:$0xff]
      %v751 = vld [vmem:[#allocation8 + $0x3c8] sm:$0xff]
      %v752 = vld [vmem:[#allocation8 + $0x3d0] sm:$0xff]
      %v753 = vld [vmem:[#allocation8 + $0x3d8] sm:$0xff]
      %v754 = vld [vmem:[#allocation8 + $0x3e0] sm:$0xff]
      %v755 = vld [vmem:[#allocation8 + $0x3e8] sm:$0xff]
      %v756 = vld [vmem:[#allocation8 + $0x3f0] sm:$0xff]
      %v757 = vld [vmem:[#allocation8 + $0x3f8] sm:$0xff]
      %v758 = vlaneseq
      %v759 = vshrl.u32 %v758, 7
      %v760 = vsub.s32 1, %v759
      %v761 = vrot.slane %v586, %v760
      %v762 = vlaneseq
      %v763 = vshrl.u32 %v762, 7
      %v764 = vsub.s32 1, %v763
      %v765 = vrot.slane %v587, %v764
      %v766 = vlaneseq
      %v767 = vshrl.u32 %v766, 7
      %v768 = vsub.s32 1, %v767
      %v769 = vrot.slane %v588, %v768
      %v770 = vlaneseq
      %v771 = vshrl.u32 %v770, 7
      %v772 = vsub.s32 1, %v771
      %v773 = vrot.slane %v589, %v772
      %v902 = vunpack.c.l.b16 %v630
      %v903 = vunpack.c.h.b16 %v630
      %v904 = vunpack.c.l.b16 %v631
      %v905 = vunpack.c.h.b16 %v631
      %v906 = vunpack.c.l.b16 %v632
      %v907 = vunpack.c.h.b16 %v632
      %v908 = vunpack.c.l.b16 %v633
      %v909 = vunpack.c.h.b16 %v633
      %v910 = vunpack.c.l.b16 %v634
      %v911 = vunpack.c.h.b16 %v634
      %v912 = vunpack.c.l.b16 %v635
      %v913 = vunpack.c.h.b16 %v635
      %v914 = vunpack.c.l.b16 %v636
      %v915 = vunpack.c.h.b16 %v636
      %v916 = vunpack.c.l.b16 %v637
      %v917 = vunpack.c.h.b16 %v637
      %v918 = vunpack.c.l.b16 %v638
      %v919 = vunpack.c.h.b16 %v638
      %v920 = vunpack.c.l.b16 %v639
      %v921 = vunpack.c.h.b16 %v639
      %v922 = vunpack.c.l.b16 %v640
      %v923 = vunpack.c.h.b16 %v640
      %v924 = vunpack.c.l.b16 %v641
      %v925 = vunpack.c.h.b16 %v641
      %v926 = vunpack.c.l.b16 %v642
      %v927 = vunpack.c.h.b16 %v642
      %v928 = vunpack.c.l.b16 %v643
      %v929 = vunpack.c.h.b16 %v643
      %v930 = vunpack.c.l.b16 %v644
      %v931 = vunpack.c.h.b16 %v644
      %v932 = vunpack.c.l.b16 %v645
      %v933 = vunpack.c.h.b16 %v645
      %v934 = vunpack.c.l.b16 %v646
      %v935 = vunpack.c.h.b16 %v646
      %v936 = vunpack.c.l.b16 %v647
      %v937 = vunpack.c.h.b16 %v647
      %v938 = vunpack.c.l.b16 %v648
      %v939 = vunpack.c.h.b16 %v648
      %v940 = vunpack.c.l.b16 %v649
      %v941 = vunpack.c.h.b16 %v649
      %v942 = vunpack.c.l.b16 %v650
      %v943 = vunpack.c.h.b16 %v650
      %v944 = vunpack.c.l.b16 %v651
      %v945 = vunpack.c.h.b16 %v651
      %v946 = vunpack.c.l.b16 %v652
      %v947 = vunpack.c.h.b16 %v652
      %v948 = vunpack.c.l.b16 %v653
      %v949 = vunpack.c.h.b16 %v653
      %v950 = vunpack.c.l.b16 %v654
      %v951 = vunpack.c.h.b16 %v654
      %v952 = vunpack.c.l.b16 %v655
      %v953 = vunpack.c.h.b16 %v655
      %v954 = vunpack.c.l.b16 %v656
      %v955 = vunpack.c.h.b16 %v656
      %v956 = vunpack.c.l.b16 %v657
      %v957 = vunpack.c.h.b16 %v657
      %v958 = vunpack.c.l.b16 %v658
      %v959 = vunpack.c.h.b16 %v658
      %v960 = vunpack.c.l.b16 %v659
      %v961 = vunpack.c.h.b16 %v659
      %v962 = vunpack.c.l.b16 %v660
      %v963 = vunpack.c.h.b16 %v660
      %v964 = vunpack.c.l.b16 %v661
      %v965 = vunpack.c.h.b16 %v661
      %v966 = vunpack.c.l.b16 %v662
      %v967 = vunpack.c.h.b16 %v662
      %v968 = vunpack.c.l.b16 %v663
      %v969 = vunpack.c.h.b16 %v663
      %v970 = vunpack.c.l.b16 %v664
      %v971 = vunpack.c.h.b16 %v664
      %v972 = vunpack.c.l.b16 %v665
      %v973 = vunpack.c.h.b16 %v665
      %v974 = vunpack.c.l.b16 %v666
      %v975 = vunpack.c.h.b16 %v666
      %v976 = vunpack.c.l.b16 %v667
      %v977 = vunpack.c.h.b16 %v667
      %v978 = vunpack.c.l.b16 %v668
      %v979 = vunpack.c.h.b16 %v668
      %v980 = vunpack.c.l.b16 %v669
      %v981 = vunpack.c.h.b16 %v669
      %v982 = vunpack.c.l.b16 %v670
      %v983 = vunpack.c.h.b16 %v670
      %v984 = vunpack.c.l.b16 %v671
      %v985 = vunpack.c.h.b16 %v671
      %v986 = vunpack.c.l.b16 %v672
      %v987 = vunpack.c.h.b16 %v672
      %v988 = vunpack.c.l.b16 %v673
      %v989 = vunpack.c.h.b16 %v673
      %v990 = vunpack.c.l.b16 %v674
      %v991 = vunpack.c.h.b16 %v674
      %v992 = vunpack.c.l.b16 %v675
      %v993 = vunpack.c.h.b16 %v675
      %v994 = vunpack.c.l.b16 %v676
      %v995 = vunpack.c.h.b16 %v676
      %v996 = vunpack.c.l.b16 %v677
      %v997 = vunpack.c.h.b16 %v677
      %v998 = vunpack.c.l.b16 %v678
      %v999 = vunpack.c.h.b16 %v678
      %v1000 = vunpack.c.l.b16 %v679
      %v1001 = vunpack.c.h.b16 %v679
      %v1002 = vunpack.c.l.b16 %v680
      %v1003 = vunpack.c.h.b16 %v680
      %v1004 = vunpack.c.l.b16 %v681
      %v1005 = vunpack.c.h.b16 %v681
      %v1006 = vunpack.c.l.b16 %v682
      %v1007 = vunpack.c.h.b16 %v682
      %v1008 = vunpack.c.l.b16 %v683
      %v1009 = vunpack.c.h.b16 %v683
      %v1010 = vunpack.c.l.b16 %v684
      %v1011 = vunpack.c.h.b16 %v684
      %v1012 = vunpack.c.l.b16 %v685
      %v1013 = vunpack.c.h.b16 %v685
      %v1014 = vunpack.c.l.b16 %v686
      %v1015 = vunpack.c.h.b16 %v686
      %v1016 = vunpack.c.l.b16 %v687
      %v1017 = vunpack.c.h.b16 %v687
      %v1018 = vunpack.c.l.b16 %v688
      %v1019 = vunpack.c.h.b16 %v688
      %v1020 = vunpack.c.l.b16 %v689
      %v1021 = vunpack.c.h.b16 %v689
      %v1022 = vunpack.c.l.b16 %v690
      %v1023 = vunpack.c.h.b16 %v690
      %v1024 = vunpack.c.l.b16 %v691
      %v1025 = vunpack.c.h.b16 %v691
      %v1026 = vunpack.c.l.b16 %v692
      %v1027 = vunpack.c.h.b16 %v692
      %v1028 = vunpack.c.l.b16 %v693
      %v1029 = vunpack.c.h.b16 %v693
      %v1030 = vunpack.c.l.b16 %v694
      %v1031 = vunpack.c.h.b16 %v694
      %v1032 = vunpack.c.l.b16 %v695
      %v1033 = vunpack.c.h.b16 %v695
      %v1034 = vunpack.c.l.b16 %v696
      %v1035 = vunpack.c.h.b16 %v696
      %v1036 = vunpack.c.l.b16 %v697
      %v1037 = vunpack.c.h.b16 %v697
      %v1038 = vunpack.c.l.b16 %v698
      %v1039 = vunpack.c.h.b16 %v698
      %v1040 = vunpack.c.l.b16 %v699
      %v1041 = vunpack.c.h.b16 %v699
      %v1042 = vunpack.c.l.b16 %v700
      %v1043 = vunpack.c.h.b16 %v700
      %v1044 = vunpack.c.l.b16 %v701
      %v1045 = vunpack.c.h.b16 %v701
      %v1046 = vunpack.c.l.b16 %v702
      %v1047 = vunpack.c.h.b16 %v702
      %v1048 = vunpack.c.l.b16 %v703
      %v1049 = vunpack.c.h.b16 %v703
      %v1050 = vunpack.c.l.b16 %v704
      %v1051 = vunpack.c.h.b16 %v704
      %v1052 = vunpack.c.l.b16 %v705
      %v1053 = vunpack.c.h.b16 %v705
      %v1054 = vunpack.c.l.b16 %v706
      %v1055 = vunpack.c.h.b16 %v706
      %v1056 = vunpack.c.l.b16 %v707
      %v1057 = vunpack.c.h.b16 %v707
      %v1058 = vunpack.c.l.b16 %v708
      %v1059 = vunpack.c.h.b16 %v708
      %v1060 = vunpack.c.l.b16 %v709
      %v1061 = vunpack.c.h.b16 %v709
      %v1062 = vunpack.c.l.b16 %v710
      %v1063 = vunpack.c.h.b16 %v710
      %v1064 = vunpack.c.l.b16 %v711
      %v1065 = vunpack.c.h.b16 %v711
      %v1066 = vunpack.c.l.b16 %v712
      %v1067 = vunpack.c.h.b16 %v712
      %v1068 = vunpack.c.l.b16 %v713
      %v1069 = vunpack.c.h.b16 %v713
      %v1070 = vunpack.c.l.b16 %v714
      %v1071 = vunpack.c.h.b16 %v714
      %v1072 = vunpack.c.l.b16 %v715
      %v1073 = vunpack.c.h.b16 %v715
      %v1074 = vunpack.c.l.b16 %v716
      %v1075 = vunpack.c.h.b16 %v716
      %v1076 = vunpack.c.l.b16 %v717
      %v1077 = vunpack.c.h.b16 %v717
      %v1078 = vunpack.c.l.b16 %v718
      %v1079 = vunpack.c.h.b16 %v718
      %v1080 = vunpack.c.l.b16 %v719
      %v1081 = vunpack.c.h.b16 %v719
      %v1082 = vunpack.c.l.b16 %v720
      %v1083 = vunpack.c.h.b16 %v720
      %v1084 = vunpack.c.l.b16 %v721
      %v1085 = vunpack.c.h.b16 %v721
      %v1086 = vunpack.c.l.b16 %v722
      %v1087 = vunpack.c.h.b16 %v722
      %v1088 = vunpack.c.l.b16 %v723
      %v1089 = vunpack.c.h.b16 %v723
      %v1090 = vunpack.c.l.b16 %v724
      %v1091 = vunpack.c.h.b16 %v724
      %v1092 = vunpack.c.l.b16 %v725
      %v1093 = vunpack.c.h.b16 %v725
      %v1094 = vunpack.c.l.b16 %v726
      %v1095 = vunpack.c.h.b16 %v726
      %v1096 = vunpack.c.l.b16 %v727
      %v1097 = vunpack.c.h.b16 %v727
      %v1098 = vunpack.c.l.b16 %v728
      %v1099 = vunpack.c.h.b16 %v728
      %v1100 = vunpack.c.l.b16 %v729
      %v1101 = vunpack.c.h.b16 %v729
      %v1102 = vunpack.c.l.b16 %v730
      %v1103 = vunpack.c.h.b16 %v730
      %v1104 = vunpack.c.l.b16 %v731
      %v1105 = vunpack.c.h.b16 %v731
      %v1106 = vunpack.c.l.b16 %v732
      %v1107 = vunpack.c.h.b16 %v732
      %v1108 = vunpack.c.l.b16 %v733
      %v1109 = vunpack.c.h.b16 %v733
      %v1110 = vunpack.c.l.b16 %v734
      %v1111 = vunpack.c.h.b16 %v734
      %v1112 = vunpack.c.l.b16 %v735
      %v1113 = vunpack.c.h.b16 %v735
      %v1114 = vunpack.c.l.b16 %v736
      %v1115 = vunpack.c.h.b16 %v736
      %v1116 = vunpack.c.l.b16 %v737
      %v1117 = vunpack.c.h.b16 %v737
      %v1118 = vunpack.c.l.b16 %v738
      %v1119 = vunpack.c.h.b16 %v738
      %v1120 = vunpack.c.l.b16 %v739
      %v1121 = vunpack.c.h.b16 %v739
      %v1122 = vunpack.c.l.b16 %v740
      %v1123 = vunpack.c.h.b16 %v740
      %v1124 = vunpack.c.l.b16 %v741
      %v1125 = vunpack.c.h.b16 %v741
      %v1126 = vunpack.c.l.b16 %v742
      %v1127 = vunpack.c.h.b16 %v742
      %v1128 = vunpack.c.l.b16 %v743
      %v1129 = vunpack.c.h.b16 %v743
      %v1130 = vunpack.c.l.b16 %v744
      %v1131 = vunpack.c.h.b16 %v744
      %v1132 = vunpack.c.l.b16 %v745
      %v1133 = vunpack.c.h.b16 %v745
      %v1134 = vunpack.c.l.b16 %v746
      %v1135 = vunpack.c.h.b16 %v746
      %v1136 = vunpack.c.l.b16 %v747
      %v1137 = vunpack.c.h.b16 %v747
      %v1138 = vunpack.c.l.b16 %v748
      %v1139 = vunpack.c.h.b16 %v748
      %v1140 = vunpack.c.l.b16 %v749
      %v1141 = vunpack.c.h.b16 %v749
      %v1142 = vunpack.c.l.b16 %v750
      %v1143 = vunpack.c.h.b16 %v750
      %v1144 = vunpack.c.l.b16 %v751
      %v1145 = vunpack.c.h.b16 %v751
      %v1146 = vunpack.c.l.b16 %v752
      %v1147 = vunpack.c.h.b16 %v752
      %v1148 = vunpack.c.l.b16 %v753
      %v1149 = vunpack.c.h.b16 %v753
      %v1150 = vunpack.c.l.b16 %v754
      %v1151 = vunpack.c.h.b16 %v754
      %v1152 = vunpack.c.l.b16 %v755
      %v1153 = vunpack.c.h.b16 %v755
      %v1154 = vunpack.c.l.b16 %v756
      %v1155 = vunpack.c.h.b16 %v756
      %v1156 = vunpack.c.l.b16 %v757
      %v1157 = vunpack.c.h.b16 %v757
      %v1158 = vpack.c.b16 %v906, %v902
      %v1159 = vpack.c.b16 %v907, %v903
      %v1160 = vpack.c.b16 %v908, %v904
      %v1161 = vpack.c.b16 %v909, %v905
      %v1162 = vpack.c.b16 %v914, %v910
      %v1163 = vpack.c.b16 %v915, %v911
      %v1164 = vpack.c.b16 %v916, %v912
      %v1165 = vpack.c.b16 %v917, %v913
      %v1166 = vpack.c.b16 %v922, %v918
      %v1167 = vpack.c.b16 %v923, %v919
      %v1168 = vpack.c.b16 %v924, %v920
      %v1169 = vpack.c.b16 %v925, %v921
      %v1170 = vpack.c.b16 %v930, %v926
      %v1171 = vpack.c.b16 %v931, %v927
      %v1172 = vpack.c.b16 %v932, %v928
      %v1173 = vpack.c.b16 %v933, %v929
      %v1174 = vpack.c.b16 %v938, %v934
      %v1175 = vpack.c.b16 %v939, %v935
      %v1176 = vpack.c.b16 %v940, %v936
      %v1177 = vpack.c.b16 %v941, %v937
      %v1178 = vpack.c.b16 %v946, %v942
      %v1179 = vpack.c.b16 %v947, %v943
      %v1180 = vpack.c.b16 %v948, %v944
      %v1181 = vpack.c.b16 %v949, %v945
      %v1182 = vpack.c.b16 %v954, %v950
      %v1183 = vpack.c.b16 %v955, %v951
      %v1184 = vpack.c.b16 %v956, %v952
      %v1185 = vpack.c.b16 %v957, %v953
      %v1186 = vpack.c.b16 %v962, %v958
      %v1187 = vpack.c.b16 %v963, %v959
      %v1188 = vpack.c.b16 %v964, %v960
      %v1189 = vpack.c.b16 %v965, %v961
      %v1190 = vpack.c.b16 %v970, %v966
      %v1191 = vpack.c.b16 %v971, %v967
      %v1192 = vpack.c.b16 %v972, %v968
      %v1193 = vpack.c.b16 %v973, %v969
      %v1194 = vpack.c.b16 %v978, %v974
      %v1195 = vpack.c.b16 %v979, %v975
      %v1196 = vpack.c.b16 %v980, %v976
      %v1197 = vpack.c.b16 %v981, %v977
      %v1198 = vpack.c.b16 %v986, %v982
      %v1199 = vpack.c.b16 %v987, %v983
      %v1200 = vpack.c.b16 %v988, %v984
      %v1201 = vpack.c.b16 %v989, %v985
      %v1202 = vpack.c.b16 %v994, %v990
      %v1203 = vpack.c.b16 %v995, %v991
      %v1204 = vpack.c.b16 %v996, %v992
      %v1205 = vpack.c.b16 %v997, %v993
      %v1206 = vpack.c.b16 %v1002, %v998
      %v1207 = vpack.c.b16 %v1003, %v999
      %v1208 = vpack.c.b16 %v1004, %v1000
      %v1209 = vpack.c.b16 %v1005, %v1001
      %v1210 = vpack.c.b16 %v1010, %v1006
      %v1211 = vpack.c.b16 %v1011, %v1007
      %v1212 = vpack.c.b16 %v1012, %v1008
      %v1213 = vpack.c.b16 %v1013, %v1009
      %v1214 = vpack.c.b16 %v1018, %v1014
      %v1215 = vpack.c.b16 %v1019, %v1015
      %v1216 = vpack.c.b16 %v1020, %v1016
      %v1217 = vpack.c.b16 %v1021, %v1017
      %v1218 = vpack.c.b16 %v1026, %v1022
      %v1219 = vpack.c.b16 %v1027, %v1023
      %v1220 = vpack.c.b16 %v1028, %v1024
      %v1221 = vpack.c.b16 %v1029, %v1025
      %v1222 = vpack.c.b16 %v1034, %v1030
      %v1223 = vpack.c.b16 %v1035, %v1031
      %v1224 = vpack.c.b16 %v1036, %v1032
      %v1225 = vpack.c.b16 %v1037, %v1033
      %v1226 = vpack.c.b16 %v1042, %v1038
      %v1227 = vpack.c.b16 %v1043, %v1039
      %v1228 = vpack.c.b16 %v1044, %v1040
      %v1229 = vpack.c.b16 %v1045, %v1041
      %v1230 = vpack.c.b16 %v1050, %v1046
      %v1231 = vpack.c.b16 %v1051, %v1047
      %v1232 = vpack.c.b16 %v1052, %v1048
      %v1233 = vpack.c.b16 %v1053, %v1049
      %v1234 = vpack.c.b16 %v1058, %v1054
      %v1235 = vpack.c.b16 %v1059, %v1055
      %v1236 = vpack.c.b16 %v1060, %v1056
      %v1237 = vpack.c.b16 %v1061, %v1057
      %v1238 = vpack.c.b16 %v1066, %v1062
      %v1239 = vpack.c.b16 %v1067, %v1063
      %v1240 = vpack.c.b16 %v1068, %v1064
      %v1241 = vpack.c.b16 %v1069, %v1065
      %v1242 = vpack.c.b16 %v1074, %v1070
      %v1243 = vpack.c.b16 %v1075, %v1071
      %v1244 = vpack.c.b16 %v1076, %v1072
      %v1245 = vpack.c.b16 %v1077, %v1073
      %v1246 = vpack.c.b16 %v1082, %v1078
      %v1247 = vpack.c.b16 %v1083, %v1079
      %v1248 = vpack.c.b16 %v1084, %v1080
      %v1249 = vpack.c.b16 %v1085, %v1081
      %v1250 = vpack.c.b16 %v1090, %v1086
      %v1251 = vpack.c.b16 %v1091, %v1087
      %v1252 = vpack.c.b16 %v1092, %v1088
      %v1253 = vpack.c.b16 %v1093, %v1089
      %v1254 = vpack.c.b16 %v1098, %v1094
      %v1255 = vpack.c.b16 %v1099, %v1095
      %v1256 = vpack.c.b16 %v1100, %v1096
      %v1257 = vpack.c.b16 %v1101, %v1097
      %v1258 = vpack.c.b16 %v1106, %v1102
      %v1259 = vpack.c.b16 %v1107, %v1103
      %v1260 = vpack.c.b16 %v1108, %v1104
      %v1261 = vpack.c.b16 %v1109, %v1105
      %v1262 = vpack.c.b16 %v1114, %v1110
      %v1263 = vpack.c.b16 %v1115, %v1111
      %v1264 = vpack.c.b16 %v1116, %v1112
      %v1265 = vpack.c.b16 %v1117, %v1113
      %v1266 = vpack.c.b16 %v1122, %v1118
      %v1267 = vpack.c.b16 %v1123, %v1119
      %v1268 = vpack.c.b16 %v1124, %v1120
      %v1269 = vpack.c.b16 %v1125, %v1121
      %v1270 = vpack.c.b16 %v1130, %v1126
      %v1271 = vpack.c.b16 %v1131, %v1127
      %v1272 = vpack.c.b16 %v1132, %v1128
      %v1273 = vpack.c.b16 %v1133, %v1129
      %v1274 = vpack.c.b16 %v1138, %v1134
      %v1275 = vpack.c.b16 %v1139, %v1135
      %v1276 = vpack.c.b16 %v1140, %v1136
      %v1277 = vpack.c.b16 %v1141, %v1137
      %v1278 = vpack.c.b16 %v1146, %v1142
      %v1279 = vpack.c.b16 %v1147, %v1143
      %v1280 = vpack.c.b16 %v1148, %v1144
      %v1281 = vpack.c.b16 %v1149, %v1145
      %v1282 = vpack.c.b16 %v1154, %v1150
      %v1283 = vpack.c.b16 %v1155, %v1151
      %v1284 = vpack.c.b16 %v1156, %v1152
      %v1285 = vpack.c.b16 %v1157, %v1153
      %1414 = vmatprep.subr.bf16.mxu0 %v1187
      %1415 = vmatpush1.bf16.msra.mxu0 %v1186
      %1416 = vmatprep.subr.bf16.mxu0 %v1183
      %1417 = vmatpush1.bf16.msra.mxu0 %v1182
      %1418 = vmatprep.subr.bf16.mxu0 %v1179
      %1419 = vmatpush1.bf16.msra.mxu0 %v1178
      %1420 = vmatprep.subr.bf16.mxu0 %v1175
      %1421 = vmatpush1.bf16.msra.mxu0 %v1174
      %1422 = vmatprep.subr.bf16.mxu0 %v1171
      %1423 = vmatpush1.bf16.msra.mxu0 %v1170
      %1424 = vmatprep.subr.bf16.mxu0 %v1167
      %1425 = vmatpush1.bf16.msra.mxu0 %v1166
      %1426 = vmatprep.subr.bf16.mxu0 %v1163
      %1427 = vmatpush1.bf16.msra.mxu0 %v1162
      %1428 = vmatprep.subr.bf16.mxu0 %v1159
      %1429 = vmatpush1.bf16.msra.mxu0 %v1158
      %1430 = vmatprep.subr.bf16.mxu0 %v1219
      %1431 = vmatpush2.bf16.msra.mxu0 %v1218
      %1432 = vmatprep.subr.bf16.mxu0 %v1215
      %1433 = vmatpush2.bf16.msra.mxu0 %v1214
      %1434 = vmatprep.subr.bf16.mxu0 %v1211
      %1435 = vmatpush2.bf16.msra.mxu0 %v1210
      %1436 = vmatprep.subr.bf16.mxu0 %v1207
      %1437 = vmatpush2.bf16.msra.mxu0 %v1206
      %1438 = vmatprep.subr.bf16.mxu0 %v1203
      %1439 = vmatpush2.bf16.msra.mxu0 %v1202
      %1440 = vmatprep.subr.bf16.mxu0 %v1199
      %1441 = vmatpush2.bf16.msra.mxu0 %v1198
      %1442 = vmatprep.subr.bf16.mxu0 %v1195
      %1443 = vmatpush2.bf16.msra.mxu0 %v1194
      %1444 = vmatprep.subr.bf16.mxu0 %v1191
      %1445 = vmatpush2.bf16.msra.mxu0 %v1190
      %1446 = vmatprep.mubr.bf16.mxu0 %v627
      %1447 = vmatmul.mubr.bf16.gmra.mxu0 %v626
      %v1448 = vpop.f32.mrf.mxu0
      %v1449 = vadd.f32 %v761, %v1448
      %v1450 = vpop.f32.mrf.mxu0
      %v1451 = vadd.f32 %v765, %v1450
      %v1452 = vpop.f32.mrf.mxu0
      %v1453 = vpop.f32.mrf.mxu0
      %1454 = vdwg.mxu0
      %1455 = vmatprep.subr.bf16.mxu0 %v1251
      %1456 = vmatpush1.bf16.msra.mxu0 %v1250
      %1457 = vmatprep.subr.bf16.mxu0 %v1247
      %1458 = vmatpush1.bf16.msra.mxu0 %v1246
      %1459 = vmatprep.subr.bf16.mxu0 %v1243
      %1460 = vmatpush1.bf16.msra.mxu0 %v1242
      %1461 = vmatprep.subr.bf16.mxu0 %v1239
      %1462 = vmatpush1.bf16.msra.mxu0 %v1238
      %1463 = vmatprep.subr.bf16.mxu0 %v1235
      %1464 = vmatpush1.bf16.msra.mxu0 %v1234
      %1465 = vmatprep.subr.bf16.mxu0 %v1231
      %1466 = vmatpush1.bf16.msra.mxu0 %v1230
      %1467 = vmatprep.subr.bf16.mxu0 %v1227
      %1468 = vmatpush1.bf16.msra.mxu0 %v1226
      %1469 = vmatprep.subr.bf16.mxu0 %v1223
      %1470 = vmatpush1.bf16.msra.mxu0 %v1222
      %1471 = vmatprep.subr.bf16.mxu0 %v1283
      %1472 = vmatpush2.bf16.msra.mxu0 %v1282
      %1473 = vmatprep.subr.bf16.mxu0 %v1279
      %1474 = vmatpush2.bf16.msra.mxu0 %v1278
      %1475 = vmatprep.subr.bf16.mxu0 %v1275
      %1476 = vmatpush2.bf16.msra.mxu0 %v1274
      %1477 = vmatprep.subr.bf16.mxu0 %v1271
      %1478 = vmatpush2.bf16.msra.mxu0 %v1270
      %1479 = vmatprep.subr.bf16.mxu0 %v1267
      %1480 = vmatpush2.bf16.msra.mxu0 %v1266
      %1481 = vmatprep.subr.bf16.mxu0 %v1263
      %1482 = vmatpush2.bf16.msra.mxu0 %v1262
      %1483 = vmatprep.subr.bf16.mxu0 %v1259
      %1484 = vmatpush2.bf16.msra.mxu0 %v1258
      %1485 = vmatprep.subr.bf16.mxu0 %v1255
      %1486 = vmatpush2.bf16.msra.mxu0 %v1254
      %1487 = vmatprep.mubr.bf16.mxu0 %v629
      %1488 = vmatmul.mubr.bf16.gmra.mxu0 %v628
      %v1489 = vpop.f32.mrf.mxu0
      %v1490 = vadd.f32 %v1449, %v1489
      %v1491 = vpop.f32.mrf.mxu0
      %v1492 = vadd.f32 %v1451, %v1491
      %v1493 = vpop.f32.mrf.mxu0
      %v1494 = vpop.f32.mrf.mxu0
      %1495 = vdwg.mxu0
      %1496 = vmatprep.subr.bf16.mxu0 %v1189
      %1497 = vmatpush1.bf16.msra.mxu0 %v1188
      %1498 = vmatprep.subr.bf16.mxu0 %v1185
      %1499 = vmatpush1.bf16.msra.mxu0 %v1184
      %1500 = vmatprep.subr.bf16.mxu0 %v1181
      %1501 = vmatpush1.bf16.msra.mxu0 %v1180
      %1502 = vmatprep.subr.bf16.mxu0 %v1177
      %1503 = vmatpush1.bf16.msra.mxu0 %v1176
      %1504 = vmatprep.subr.bf16.mxu0 %v1173
      %1505 = vmatpush1.bf16.msra.mxu0 %v1172
      %1506 = vmatprep.subr.bf16.mxu0 %v1169
      %1507 = vmatpush1.bf16.msra.mxu0 %v1168
      %1508 = vmatprep.subr.bf16.mxu0 %v1165
      %1509 = vmatpush1.bf16.msra.mxu0 %v1164
      %1510 = vmatprep.subr.bf16.mxu0 %v1161
      %1511 = vmatpush1.bf16.msra.mxu0 %v1160
      %1512 = vmatprep.subr.bf16.mxu0 %v1221
      %1513 = vmatpush2.bf16.msra.mxu0 %v1220
      %1514 = vmatprep.subr.bf16.mxu0 %v1217
      %1515 = vmatpush2.bf16.msra.mxu0 %v1216
      %1516 = vmatprep.subr.bf16.mxu0 %v1213
      %1517 = vmatpush2.bf16.msra.mxu0 %v1212
      %1518 = vmatprep.subr.bf16.mxu0 %v1209
      %1519 = vmatpush2.bf16.msra.mxu0 %v1208
      %1520 = vmatprep.subr.bf16.mxu0 %v1205
      %1521 = vmatpush2.bf16.msra.mxu0 %v1204
      %1522 = vmatprep.subr.bf16.mxu0 %v1201
      %1523 = vmatpush2.bf16.msra.mxu0 %v1200
      %1524 = vmatprep.subr.bf16.mxu0 %v1197
      %1525 = vmatpush2.bf16.msra.mxu0 %v1196
      %1526 = vmatprep.subr.bf16.mxu0 %v1193
      %1527 = vmatpush2.bf16.msra.mxu0 %v1192
      %1528 = vmatprep.mubr.bf16.mxu0 %v627
      %1529 = vmatmul.mubr.bf16.gmra.mxu0 %v626
      %v1530 = vpop.f32.mrf.mxu0
      %v1531 = vadd.f32 %v769, %v1530
      %v1532 = vpop.f32.mrf.mxu0
      %v1533 = vadd.f32 %v773, %v1532
      %v1534 = vpop.f32.mrf.mxu0
      %v1535 = vpop.f32.mrf.mxu0
      %1536 = vdwg.mxu0
      %1537 = vmatprep.subr.bf16.mxu0 %v1253
      %1538 = vmatpush1.bf16.msra.mxu0 %v1252
      %1539 = vmatprep.subr.bf16.mxu0 %v1249
      %1540 = vmatpush1.bf16.msra.mxu0 %v1248
      %1541 = vmatprep.subr.bf16.mxu0 %v1245
      %1542 = vmatpush1.bf16.msra.mxu0 %v1244
      %1543 = vmatprep.subr.bf16.mxu0 %v1241
      %1544 = vmatpush1.bf16.msra.mxu0 %v1240
      %1545 = vmatprep.subr.bf16.mxu0 %v1237
      %1546 = vmatpush1.bf16.msra.mxu0 %v1236
      %1547 = vmatprep.subr.bf16.mxu0 %v1233
      %1548 = vmatpush1.bf16.msra.mxu0 %v1232
      %1549 = vmatprep.subr.bf16.mxu0 %v1229
      %1550 = vmatpush1.bf16.msra.mxu0 %v1228
      %1551 = vmatprep.subr.bf16.mxu0 %v1225
      %1552 = vmatpush1.bf16.msra.mxu0 %v1224
      %1553 = vmatprep.subr.bf16.mxu0 %v1285
      %1554 = vmatpush2.bf16.msra.mxu0 %v1284
      %1555 = vmatprep.subr.bf16.mxu0 %v1281
      %1556 = vmatpush2.bf16.msra.mxu0 %v1280
      %1557 = vmatprep.subr.bf16.mxu0 %v1277
      %1558 = vmatpush2.bf16.msra.mxu0 %v1276
      %1559 = vmatprep.subr.bf16.mxu0 %v1273
      %1560 = vmatpush2.bf16.msra.mxu0 %v1272
      %1561 = vmatprep.subr.bf16.mxu0 %v1269
      %1562 = vmatpush2.bf16.msra.mxu0 %v1268
      %1563 = vmatprep.subr.bf16.mxu0 %v1265
      %1564 = vmatpush2.bf16.msra.mxu0 %v1264
      %1565 = vmatprep.subr.bf16.mxu0 %v1261
      %1566 = vmatpush2.bf16.msra.mxu0 %v1260
      %1567 = vmatprep.subr.bf16.mxu0 %v1257
      %1568 = vmatpush2.bf16.msra.mxu0 %v1256
      %1569 = vmatprep.mubr.bf16.mxu0 %v629
      %1570 = vmatmul.mubr.bf16.gmra.mxu0 %v628
      %v1571 = vpop.f32.mrf.mxu0
      %v1572 = vadd.f32 %v1531, %v1571
      %v1573 = vpop.f32.mrf.mxu0
      %v1574 = vadd.f32 %v1533, %v1573
      %v1575 = vpop.f32.mrf.mxu0
      %v1576 = vpop.f32.mrf.mxu0
      %1577 = vdwg.mxu0
      %v1578 = vlaneseq
      %v1579 = vshrl.u32 %v1578, 7
      %vm1580 = vcmp.lt.s32.totalorder %v1579, 4
      %v1581 = vsel %vm1580, 1, 0
      %v1582 = vcvt.s32.f32 %v1581
      %v1583 = vmul.f32 %v1490, %v1582
      %v1584 = vmul.f32 %v1492, %v1582
      %v1585 = vmul.f32 %v1572, %v1582
      %v1586 = vmul.f32 %v1574, %v1582
      %v1587 = vrot.slane %v1583, 4
      %v1588 = vadd.f32 %v1583, %v1587
      %v1589 = vrot.slane %v1588, 2
      %v1590 = vadd.f32 %v1588, %v1589
      %v1591 = vrot.slane %v1590, 1
      %v1592 = vadd.f32 %v1590, %v1591
      %v1593 = vrot.slane %v1584, 4
      %v1594 = vadd.f32 %v1584, %v1593
      %v1595 = vrot.slane %v1594, 2
      %v1596 = vadd.f32 %v1594, %v1595
      %v1597 = vrot.slane %v1596, 1
      %v1598 = vadd.f32 %v1596, %v1597
      %v1599 = vrot.slane %v1585, 4
      %v1600 = vadd.f32 %v1585, %v1599
      %v1601 = vrot.slane %v1600, 2
      %v1602 = vadd.f32 %v1600, %v1601
      %v1603 = vrot.slane %v1602, 1
      %v1604 = vadd.f32 %v1602, %v1603
      %v1605 = vrot.slane %v1586, 4
      %v1606 = vadd.f32 %v1586, %v1605
      %v1607 = vrot.slane %v1606, 2
      %v1608 = vadd.f32 %v1606, %v1607
      %v1609 = vrot.slane %v1608, 1
      %v1610 = vadd.f32 %v1608, %v1609
      %v1611 = vmul.f32 %v1592, 0.25
      %v1612 = vmul.f32 %v1598, 0.25
      %v1613 = vmul.f32 %v1604, 0.25
      %v1614 = vmul.f32 %v1610, 0.25
      %v1615 = vsub.f32 %v1490, %v1611
      %v1616 = vsub.f32 %v1492, %v1612
      %v1617 = vsub.f32 %v1572, %v1613
      %v1618 = vsub.f32 %v1574, %v1614
      %v1619 = vmul.f32 %v1615, %v1582
      %v1620 = vmul.f32 %v1616, %v1582
      %v1621 = vmul.f32 %v1617, %v1582
      %v1622 = vmul.f32 %v1618, %v1582
      %v1623 = vmul.f32 %v1619, %v1619
      %v1624 = vmul.f32 %v1620, %v1620
      %v1625 = vmul.f32 %v1621, %v1621
      %v1626 = vmul.f32 %v1622, %v1622
      %v1627 = vrot.slane %v1623, 4
      %v1628 = vadd.f32 %v1623, %v1627
      %v1629 = vrot.slane %v1628, 2
      %v1630 = vadd.f32 %v1628, %v1629
      %v1631 = vrot.slane %v1630, 1
      %v1632 = vadd.f32 %v1630, %v1631
      %v1633 = vrot.slane %v1624, 4
      %v1634 = vadd.f32 %v1624, %v1633
      %v1635 = vrot.slane %v1634, 2
      %v1636 = vadd.f32 %v1634, %v1635
      %v1637 = vrot.slane %v1636, 1
      %v1638 = vadd.f32 %v1636, %v1637
      %v1639 = vrot.slane %v1625, 4
      %v1640 = vadd.f32 %v1625, %v1639
      %v1641 = vrot.slane %v1640, 2
      %v1642 = vadd.f32 %v1640, %v1641
      %v1643 = vrot.slane %v1642, 1
      %v1644 = vadd.f32 %v1642, %v1643
      %v1645 = vrot.slane %v1626, 4
      %v1646 = vadd.f32 %v1626, %v1645
      %v1647 = vrot.slane %v1646, 2
      %v1648 = vadd.f32 %v1646, %v1647
      %v1649 = vrot.slane %v1648, 1
      %v1650 = vadd.f32 %v1648, %v1649
      %v1651 = vmul.f32 %v1632, 0.25
      %v1652 = vmul.f32 %v1638, 0.25
      %v1653 = vmul.f32 %v1644, 0.25
      %v1654 = vmul.f32 %v1650, 0.25
      %v1655 = vadd.f32 %v1651, 1e-05
      %v1656 = vadd.f32 %v1652, 1e-05
      %v1657 = vadd.f32 %v1653, 1e-05
      %v1658 = vadd.f32 %v1654, 1e-05
      %v1659 = vrsqrt.pop %v1655
      %v1660 = vrsqrt.pop %v1656
      %v1661 = vrsqrt.pop %v1657
      %v1662 = vrsqrt.pop %v1658
      %v1663 = vmul.f32 %v1659, %v586
      %v1664 = vmul.f32 %v1660, %v587
      %v1665 = vmul.f32 %v1661, %v588
      %v1666 = vmul.f32 %v1662, %v589
      %v1667 = vlaneseq
      %v1668 = vshrl.u32 %v1667, 7
      %v1669 = vsub.s32 2, %v1668
      %v1670 = vrot.slane %v1663, %v1669
      %v1671 = vlaneseq
      %v1672 = vshrl.u32 %v1671, 7
      %v1673 = vsub.s32 2, %v1672
      %v1674 = vrot.slane %v1664, %v1673
      %v1675 = vlaneseq
      %v1676 = vshrl.u32 %v1675, 7
      %v1677 = vsub.s32 2, %v1676
      %v1678 = vrot.slane %v1665, %v1677
      %v1679 = vlaneseq
      %v1680 = vshrl.u32 %v1679, 7
      %v1681 = vsub.s32 2, %v1680
      %v1682 = vrot.slane %v1666, %v1681
      %v1683 = vmul.f32 %v1619, %v1670
      %v1684 = vmul.f32 %v1620, %v1674
      %v1685 = vmul.f32 %v1621, %v1678
      %v1686 = vmul.f32 %v1622, %v1682
      %v1687 = vlaneseq
      %v1688 = vshrl.u32 %v1687, 7
      %v1689 = vsub.s32 3, %v1688
      %v1690 = vrot.slane %v586, %v1689
      %v1691 = vlaneseq
      %v1692 = vshrl.u32 %v1691, 7
      %v1693 = vsub.s32 3, %v1692
      %v1694 = vrot.slane %v587, %v1693
      %v1695 = vlaneseq
      %v1696 = vshrl.u32 %v1695, 7
      %v1697 = vsub.s32 3, %v1696
      %v1698 = vrot.slane %v588, %v1697
      %v1699 = vlaneseq
      %v1700 = vshrl.u32 %v1699, 7
      %v1701 = vsub.s32 3, %v1700
      %v1702 = vrot.slane %v589, %v1701
      %v1703 = vadd.f32 %v1683, %v1690
      %v1704 = vadd.f32 %v1684, %v1694
      %v1705 = vadd.f32 %v1685, %v1698
      %v1706 = vadd.f32 %v1686, %v1702
      %vm1707 = vcmp.gt.f32.partialorder %v1703, 0.0
      %vm1708 = vcmp.gt.f32.partialorder %v1704, 0.0
      %vm1709 = vcmp.gt.f32.partialorder %v1705, 0.0
      %vm1710 = vcmp.gt.f32.partialorder %v1706, 0.0
      %v1711 = vmul.f32 %v1703, 0.2
      %v1712 = vmul.f32 %v1704, 0.2
      %v1713 = vmul.f32 %v1705, 0.2
      %v1714 = vmul.f32 %v1706, 0.2
      %v1715 = vsel %vm1707, %v1703, %v1711
      %v1716 = vsel %vm1708, %v1704, %v1712
      %v1717 = vsel %vm1709, %v1705, %v1713
      %v1718 = vsel %vm1710, %v1706, %v1714
      %v1719 = vpack.c.bf16 %v1715, %v1715
      %v1720 = vpack.c.bf16 %v1716, %v1716
      %v1721 = vpack.c.bf16 %v1717, %v1717
      %v1722 = vpack.c.bf16 %v1718, %v1718
      %v1723 = vld [vmem:[#allocation9] sm:$0xf]
      %v1724 = vld [vmem:[#allocation9 + $0x4] sm:$0xf]
      %v1725 = vld [vmem:[#allocation9 + $0x8] sm:$0xf]
      %v1726 = vld [vmem:[#allocation9 + $0xc] sm:$0xf]
      %v1727 = vld [vmem:[#allocation9 + $0x10] sm:$0xf]
      %v1728 = vld [vmem:[#allocation9 + $0x14] sm:$0xf]
      %v1729 = vld [vmem:[#allocation9 + $0x18] sm:$0xf]
      %v1730 = vld [vmem:[#allocation9 + $0x1c] sm:$0xf]
      %v1731 = vld [vmem:[#allocation9 + $0x20] sm:$0xf]
      %v1732 = vld [vmem:[#allocation9 + $0x24] sm:$0xf]
      %v1733 = vld [vmem:[#allocation9 + $0x28] sm:$0xf]
      %v1734 = vld [vmem:[#allocation9 + $0x2c] sm:$0xf]
      %v1735 = vld [vmem:[#allocation9 + $0x30] sm:$0xf]
      %v1736 = vld [vmem:[#allocation9 + $0x34] sm:$0xf]
      %v1737 = vld [vmem:[#allocation9 + $0x38] sm:$0xf]
      %v1738 = vld [vmem:[#allocation9 + $0x3c] sm:$0xf]
      %v1739 = vld [vmem:[#allocation9 + $0x40] sm:$0xf]
      %v1740 = vld [vmem:[#allocation9 + $0x44] sm:$0xf]
      %v1741 = vld [vmem:[#allocation9 + $0x48] sm:$0xf]
      %v1742 = vld [vmem:[#allocation9 + $0x4c] sm:$0xf]
      %v1743 = vld [vmem:[#allocation9 + $0x50] sm:$0xf]
      %v1744 = vld [vmem:[#allocation9 + $0x54] sm:$0xf]
      %v1745 = vld [vmem:[#allocation9 + $0x58] sm:$0xf]
      %v1746 = vld [vmem:[#allocation9 + $0x5c] sm:$0xf]
      %v1747 = vld [vmem:[#allocation9 + $0x60] sm:$0xf]
      %v1748 = vld [vmem:[#allocation9 + $0x64] sm:$0xf]
      %v1749 = vld [vmem:[#allocation9 + $0x68] sm:$0xf]
      %v1750 = vld [vmem:[#allocation9 + $0x6c] sm:$0xf]
      %v1751 = vld [vmem:[#allocation9 + $0x70] sm:$0xf]
      %v1752 = vld [vmem:[#allocation9 + $0x74] sm:$0xf]
      %v1753 = vld [vmem:[#allocation9 + $0x78] sm:$0xf]
      %v1754 = vld [vmem:[#allocation9 + $0x7c] sm:$0xf]
      %v1755 = vld [vmem:[#allocation9 + $0x80] sm:$0xf]
      %v1756 = vld [vmem:[#allocation9 + $0x84] sm:$0xf]
      %v1757 = vld [vmem:[#allocation9 + $0x88] sm:$0xf]
      %v1758 = vld [vmem:[#allocation9 + $0x8c] sm:$0xf]
      %v1759 = vld [vmem:[#allocation9 + $0x90] sm:$0xf]
      %v1760 = vld [vmem:[#allocation9 + $0x94] sm:$0xf]
      %v1761 = vld [vmem:[#allocation9 + $0x98] sm:$0xf]
      %v1762 = vld [vmem:[#allocation9 + $0x9c] sm:$0xf]
      %v1763 = vld [vmem:[#allocation9 + $0xa0] sm:$0xf]
      %v1764 = vld [vmem:[#allocation9 + $0xa4] sm:$0xf]
      %v1765 = vld [vmem:[#allocation9 + $0xa8] sm:$0xf]
      %v1766 = vld [vmem:[#allocation9 + $0xac] sm:$0xf]
      %v1767 = vld [vmem:[#allocation9 + $0xb0] sm:$0xf]
      %v1768 = vld [vmem:[#allocation9 + $0xb4] sm:$0xf]
      %v1769 = vld [vmem:[#allocation9 + $0xb8] sm:$0xf]
      %v1770 = vld [vmem:[#allocation9 + $0xbc] sm:$0xf]
      %v1771 = vld [vmem:[#allocation9 + $0xc0] sm:$0xf]
      %v1772 = vld [vmem:[#allocation9 + $0xc4] sm:$0xf]
      %v1773 = vld [vmem:[#allocation9 + $0xc8] sm:$0xf]
      %v1774 = vld [vmem:[#allocation9 + $0xcc] sm:$0xf]
      %v1775 = vld [vmem:[#allocation9 + $0xd0] sm:$0xf]
      %v1776 = vld [vmem:[#allocation9 + $0xd4] sm:$0xf]
      %v1777 = vld [vmem:[#allocation9 + $0xd8] sm:$0xf]
      %v1778 = vld [vmem:[#allocation9 + $0xdc] sm:$0xf]
      %v1779 = vld [vmem:[#allocation9 + $0xe0] sm:$0xf]
      %v1780 = vld [vmem:[#allocation9 + $0xe4] sm:$0xf]
      %v1781 = vld [vmem:[#allocation9 + $0xe8] sm:$0xf]
      %v1782 = vld [vmem:[#allocation9 + $0xec] sm:$0xf]
      %v1783 = vld [vmem:[#allocation9 + $0xf0] sm:$0xf]
      %v1784 = vld [vmem:[#allocation9 + $0xf4] sm:$0xf]
      %v1785 = vld [vmem:[#allocation9 + $0xf8] sm:$0xf]
      %v1786 = vld [vmem:[#allocation9 + $0xfc] sm:$0xf]
      %v1787 = vld [vmem:[%s5] sm:$0x1]
      %v1789 = vlaneseq
      %v1790 = vshrl.u32 %v1789, 7
      %v1791 = vsub.s32 0, %v1790
      %v1792 = vrot.slane %v1787, %v1791
      %v1858 = vunpack.c.l.b16 %v1723
      %v1859 = vunpack.c.l.b16 %v1724
      %v1860 = vunpack.c.l.b16 %v1725
      %v1861 = vunpack.c.l.b16 %v1726
      %v1862 = vunpack.c.l.b16 %v1727
      %v1863 = vunpack.c.l.b16 %v1728
      %v1864 = vunpack.c.l.b16 %v1729
      %v1865 = vunpack.c.l.b16 %v1730
      %v1866 = vunpack.c.l.b16 %v1731
      %v1867 = vunpack.c.l.b16 %v1732
      %v1868 = vunpack.c.l.b16 %v1733
      %v1869 = vunpack.c.l.b16 %v1734
      %v1870 = vunpack.c.l.b16 %v1735
      %v1871 = vunpack.c.l.b16 %v1736
      %v1872 = vunpack.c.l.b16 %v1737
      %v1873 = vunpack.c.l.b16 %v1738
      %v1874 = vunpack.c.l.b16 %v1739
      %v1875 = vunpack.c.l.b16 %v1740
      %v1876 = vunpack.c.l.b16 %v1741
      %v1877 = vunpack.c.l.b16 %v1742
      %v1878 = vunpack.c.l.b16 %v1743
      %v1879 = vunpack.c.l.b16 %v1744
      %v1880 = vunpack.c.l.b16 %v1745
      %v1881 = vunpack.c.l.b16 %v1746
      %v1882 = vunpack.c.l.b16 %v1747
      %v1883 = vunpack.c.l.b16 %v1748
      %v1884 = vunpack.c.l.b16 %v1749
      %v1885 = vunpack.c.l.b16 %v1750
      %v1886 = vunpack.c.l.b16 %v1751
      %v1887 = vunpack.c.l.b16 %v1752
      %v1888 = vunpack.c.l.b16 %v1753
      %v1889 = vunpack.c.l.b16 %v1754
      %v1890 = vunpack.c.l.b16 %v1755
      %v1891 = vunpack.c.l.b16 %v1756
      %v1892 = vunpack.c.l.b16 %v1757
      %v1893 = vunpack.c.l.b16 %v1758
      %v1894 = vunpack.c.l.b16 %v1759
      %v1895 = vunpack.c.l.b16 %v1760
      %v1896 = vunpack.c.l.b16 %v1761
      %v1897 = vunpack.c.l.b16 %v1762
      %v1898 = vunpack.c.l.b16 %v1763
      %v1899 = vunpack.c.l.b16 %v1764
      %v1900 = vunpack.c.l.b16 %v1765
      %v1901 = vunpack.c.l.b16 %v1766
      %v1902 = vunpack.c.l.b16 %v1767
      %v1903 = vunpack.c.l.b16 %v1768
      %v1904 = vunpack.c.l.b16 %v1769
      %v1905 = vunpack.c.l.b16 %v1770
      %v1906 = vunpack.c.l.b16 %v1771
      %v1907 = vunpack.c.l.b16 %v1772
      %v1908 = vunpack.c.l.b16 %v1773
      %v1909 = vunpack.c.l.b16 %v1774
      %v1910 = vunpack.c.l.b16 %v1775
      %v1911 = vunpack.c.l.b16 %v1776
      %v1912 = vunpack.c.l.b16 %v1777
      %v1913 = vunpack.c.l.b16 %v1778
      %v1914 = vunpack.c.l.b16 %v1779
      %v1915 = vunpack.c.l.b16 %v1780
      %v1916 = vunpack.c.l.b16 %v1781
      %v1917 = vunpack.c.l.b16 %v1782
      %v1918 = vunpack.c.l.b16 %v1783
      %v1919 = vunpack.c.l.b16 %v1784
      %v1920 = vunpack.c.l.b16 %v1785
      %v1921 = vunpack.c.l.b16 %v1786
      %v1922 = vpack.c.b16 %v1859, %v1858
      %v1923 = vpack.c.b16 %v1861, %v1860
      %v1924 = vpack.c.b16 %v1863, %v1862
      %v1925 = vpack.c.b16 %v1865, %v1864
      %v1926 = vpack.c.b16 %v1867, %v1866
      %v1927 = vpack.c.b16 %v1869, %v1868
      %v1928 = vpack.c.b16 %v1871, %v1870
      %v1929 = vpack.c.b16 %v1873, %v1872
      %v1930 = vpack.c.b16 %v1875, %v1874
      %v1931 = vpack.c.b16 %v1877, %v1876
      %v1932 = vpack.c.b16 %v1879, %v1878
      %v1933 = vpack.c.b16 %v1881, %v1880
      %v1934 = vpack.c.b16 %v1883, %v1882
      %v1935 = vpack.c.b16 %v1885, %v1884
      %v1936 = vpack.c.b16 %v1887, %v1886
      %v1937 = vpack.c.b16 %v1889, %v1888
      %v1938 = vpack.c.b16 %v1891, %v1890
      %v1939 = vpack.c.b16 %v1893, %v1892
      %v1940 = vpack.c.b16 %v1895, %v1894
      %v1941 = vpack.c.b16 %v1897, %v1896
      %v1942 = vpack.c.b16 %v1899, %v1898
      %v1943 = vpack.c.b16 %v1901, %v1900
      %v1944 = vpack.c.b16 %v1903, %v1902
      %v1945 = vpack.c.b16 %v1905, %v1904
      %v1946 = vpack.c.b16 %v1907, %v1906
      %v1947 = vpack.c.b16 %v1909, %v1908
      %v1948 = vpack.c.b16 %v1911, %v1910
      %v1949 = vpack.c.b16 %v1913, %v1912
      %v1950 = vpack.c.b16 %v1915, %v1914
      %v1951 = vpack.c.b16 %v1917, %v1916
      %v1952 = vpack.c.b16 %v1919, %v1918
      %v1953 = vpack.c.b16 %v1921, %v1920
      %1986 = vmatprep.subr.bf16.mxu0 0
      %1987 = vmatpush1.bf16.msra.mxu0 %v1929
      %1988 = vmatprep.subr.bf16.mxu0 0
      %1989 = vmatpush1.bf16.msra.mxu0 %v1928
      %1990 = vmatprep.subr.bf16.mxu0 0
      %1991 = vmatpush1.bf16.msra.mxu0 %v1927
      %1992 = vmatprep.subr.bf16.mxu0 0
      %1993 = vmatpush1.bf16.msra.mxu0 %v1926
      %1994 = vmatprep.subr.bf16.mxu0 0
      %1995 = vmatpush1.bf16.msra.mxu0 %v1925
      %1996 = vmatprep.subr.bf16.mxu0 0
      %1997 = vmatpush1.bf16.msra.mxu0 %v1924
      %1998 = vmatprep.subr.bf16.mxu0 0
      %1999 = vmatpush1.bf16.msra.mxu0 %v1923
      %2000 = vmatprep.subr.bf16.mxu0 0
      %2001 = vmatpush1.bf16.msra.mxu0 %v1922
      %2002 = vmatprep.subr.bf16.mxu0 0
      %2003 = vmatpush2.bf16.msra.mxu0 %v1937
      %2004 = vmatprep.subr.bf16.mxu0 0
      %2005 = vmatpush2.bf16.msra.mxu0 %v1936
      %2006 = vmatprep.subr.bf16.mxu0 0
      %2007 = vmatpush2.bf16.msra.mxu0 %v1935
      %2008 = vmatprep.subr.bf16.mxu0 0
      %2009 = vmatpush2.bf16.msra.mxu0 %v1934
      %2010 = vmatprep.subr.bf16.mxu0 0
      %2011 = vmatpush2.bf16.msra.mxu0 %v1933
      %2012 = vmatprep.subr.bf16.mxu0 0
      %2013 = vmatpush2.bf16.msra.mxu0 %v1932
      %2014 = vmatprep.subr.bf16.mxu0 0
      %2015 = vmatpush2.bf16.msra.mxu0 %v1931
      %2016 = vmatprep.subr.bf16.mxu0 0
      %2017 = vmatpush2.bf16.msra.mxu0 %v1930
      %2018 = vmatprep.mubr.bf16.mxu0 %v1720
      %2019 = vmatmul.mubr.bf16.gmra.mxu0 %v1719
      %v2020 = vpop.f32.mrf.mxu0
      %v2021 = vadd.f32 %v1792, %v2020
      %v2022 = vpop.f32.mrf.mxu0
      %v2023 = vpop.f32.mrf.mxu0
      %v2024 = vpop.f32.mrf.mxu0
      %2025 = vdwg.mxu0
      %2026 = vmatprep.subr.bf16.mxu0 0
      %2027 = vmatpush1.bf16.msra.mxu0 %v1945
      %2028 = vmatprep.subr.bf16.mxu0 0
      %2029 = vmatpush1.bf16.msra.mxu0 %v1944
      %2030 = vmatprep.subr.bf16.mxu0 0
      %2031 = vmatpush1.bf16.msra.mxu0 %v1943
      %2032 = vmatprep.subr.bf16.mxu0 0
      %2033 = vmatpush1.bf16.msra.mxu0 %v1942
      %2034 = vmatprep.subr.bf16.mxu0 0
      %2035 = vmatpush1.bf16.msra.mxu0 %v1941
      %2036 = vmatprep.subr.bf16.mxu0 0
      %2037 = vmatpush1.bf16.msra.mxu0 %v1940
      %2038 = vmatprep.subr.bf16.mxu0 0
      %2039 = vmatpush1.bf16.msra.mxu0 %v1939
      %2040 = vmatprep.subr.bf16.mxu0 0
      %2041 = vmatpush1.bf16.msra.mxu0 %v1938
      %2042 = vmatprep.subr.bf16.mxu0 0
      %2043 = vmatpush2.bf16.msra.mxu0 %v1953
      %2044 = vmatprep.subr.bf16.mxu0 0
      %2045 = vmatpush2.bf16.msra.mxu0 %v1952
      %2046 = vmatprep.subr.bf16.mxu0 0
      %2047 = vmatpush2.bf16.msra.mxu0 %v1951
      %2048 = vmatprep.subr.bf16.mxu0 0
      %2049 = vmatpush2.bf16.msra.mxu0 %v1950
      %2050 = vmatprep.subr.bf16.mxu0 0
      %2051 = vmatpush2.bf16.msra.mxu0 %v1949
      %2052 = vmatprep.subr.bf16.mxu0 0
      %2053 = vmatpush2.bf16.msra.mxu0 %v1948
      %2054 = vmatprep.subr.bf16.mxu0 0
      %2055 = vmatpush2.bf16.msra.mxu0 %v1947
      %2056 = vmatprep.subr.bf16.mxu0 0
      %2057 = vmatpush2.bf16.msra.mxu0 %v1946
      %2058 = vmatprep.mubr.bf16.mxu0 %v1722
      %2059 = vmatmul.mubr.bf16.gmra.mxu0 %v1721
      %v2060 = vpop.f32.mrf.mxu0
      %v2061 = vadd.f32 %v2021, %v2060
      %v2062 = vpop.f32.mrf.mxu0
      %v2063 = vpop.f32.mrf.mxu0
      %v2064 = vpop.f32.mrf.mxu0
      %2065 = vdwg.mxu0
      %2066 = vst [vmem:[#allocation12] sm:$0xff] %v2061
    $region53: #{tpu_custom_call.1} parent=1 // pred_fallthru
      _
    // Predicated region
    $region54: #{tpu_custom_call.1} parent=1 // pred_check
      _
    $region55: #{tpu_custom_call.1} parent=1 // pred_check_branch
      %2068 = sbr.rel (0) target = $region57
    $region56: #{tpu_custom_call.1} parent=1 // pred_region
      %s2070 = ssub.s32 128, 128
      %2071 = vsyncadd [#allocation5], %s2070
      %s2073 = sshll.u32 [#allocation12], 4
      %s2074 = int_to_ptr.vmem [resolvable:$true] %s2073
      %2076 = dma.vmem_to_hbm [thread:$0]  %s2074, 128, %s6, [#allocation5]
    $region57: #{tpu_custom_call.1} parent=1 // pred_fallthru
      _
    // Predicated region
    $region58: #{tpu_custom_call.1} parent=1 // pred_check
      _
    $region59: #{tpu_custom_call.1} parent=1 // pred_check_branch
      %2078 = sbr.rel (0) target = $region61
    $region60: #{tpu_custom_call.1} parent=1 // pred_region
      %2079 = dma.done [#allocation5], 128
    $region61: #{tpu_custom_call.1} parent=1 // pred_fallthru
      _
    %2080 = vsyncpa [#allocation4], 1
    %2081 = vsyncpa [#allocation7], 1
    %2082 = vsyncpa [#allocation10], 1
    %2083 = vsyncpa [#allocation5], 1

</llo_original>
